<compile_context>
chip_gen: v7x
topology: tpu7x:2x2x1
jax: 0.10.0
libtpu: 0.0.40
codegen_flags: <defaults>
</compile_context>

<pallas_src>
import functools
import math

import jax
import jax.numpy as jnp
from jax import lax
from jax.experimental import pallas as pl
from jax.experimental.pallas import tpu as pltpu


_VMEM = pl.BlockSpec(memory_space=pltpu.MemorySpace.VMEM)


# ----------------------------------------------------------------------------
# Fused kernel
# ----------------------------------------------------------------------------

def _layernorm(x, g, b, eps):
    # fp32 statistics (keeps v5e-friendly fp32 elementwise epilogues).
    mean = jnp.mean(x, axis=-1, keepdims=True)
    var = jnp.mean(jnp.square(x - mean), axis=-1, keepdims=True)
    return (x - mean) * lax.rsqrt(var + eps) * g + b


def _bert_spc_kernel(
    ids_ref, segs_ref,
    word_emb_ref, seg_emb_ref, pos_emb_ref,
    emb_ln_g_ref, emb_ln_b_ref,
    wqkv_ref, bqkv_ref, wo_ref, bo_ref,
    attn_ln_g_ref, attn_ln_b_ref,
    w1_ref, b1_ref, w2_ref, b2_ref,
    ffn_ln_g_ref, ffn_ln_b_ref,
    wp_ref, bp_ref, wd_ref, bd_ref,
    logits_ref,
    *, B, S, D, H, eps,
):
    f32 = jnp.float32
    cdt = wqkv_ref.dtype          # bf16 matmul operands, fp32 accumulation
    BS = B * S
    dh = D // H
    scale = 1.0 / math.sqrt(dh)

    # ---- embeddings: data-dependent gathers as one-hot matmuls on the MXU ----
    ids = ids_ref[...]            # (BS, 1) int32
    segs = segs_ref[...]          # (BS, 1) int32
    vocab = word_emb_ref.shape[0]
    tvocab = seg_emb_ref.shape[0]
    word_oh = (ids == lax.broadcasted_iota(jnp.int32, (BS, vocab), 1)).astype(f32)
    seg_oh = (segs == lax.broadcasted_iota(jnp.int32, (BS, tvocab), 1)).astype(f32)
    emb = (jnp.dot(word_oh, word_emb_ref[...], preferred_element_type=f32)
           + jnp.dot(seg_oh, seg_emb_ref[...], preferred_element_type=f32))
    pos = pos_emb_ref[0:S, :]                                    # (S, D) f32
    emb = emb + jnp.concatenate([pos] * B, axis=0)               # broadcast over batch
    h = _layernorm(emb, emb_ln_g_ref[...], emb_ln_b_ref[...], eps)

    # ---- encoder layer: fused QKV projection + per-(batch, head) attention ----
    qkv = (jnp.dot(h.astype(cdt), wqkv_ref[...], preferred_element_type=f32)
           + bqkv_ref[...])                                      # (BS, 3D)
    attn_rows = []
    for b in range(B):
        r0, r1 = b * S, (b + 1) * S
        acc = jnp.zeros((S, D), f32)
        for hd in range(H):
            c0, c1 = hd * dh, (hd + 1) * dh
            q_h = qkv[r0:r1, c0:c1].astype(cdt)                  # (S, dh)
            k_h = qkv[r0:r1, D + c0:D + c1].astype(cdt)
            v_h = qkv[r0:r1, 2 * D + c0:2 * D + c1].astype(cdt)
            # contract on the last dims (no explicit K transpose / XLU push)
            s = lax.dot_general(q_h, k_h, (((1,), (1,)), ((), ())),
                                preferred_element_type=f32) * scale     # (S, S)
            s = s - jnp.max(s, axis=-1, keepdims=True)
            p = jnp.exp(s)
            p = p * pl.reciprocal(jnp.sum(p, axis=-1, keepdims=True), approx=True)
            ctx_h = jnp.dot(p.astype(cdt), v_h, preferred_element_type=f32)  # (S, dh)
            # fold the output projection in per head:
            #   concat_h(ctx_h) @ Wo == sum_h ctx_h @ Wo[h*dh:(h+1)*dh, :]
            acc = acc + jnp.dot(ctx_h.astype(cdt), wo_ref[c0:c1, :],
                                preferred_element_type=f32)
        attn_rows.append(acc)
    attn_out = jnp.concatenate(attn_rows, axis=0) + bo_ref[...]  # (BS, D)
    # residual add fused into the layernorm (no wrapper-side add / HBM round-trip)
    h = _layernorm(h + attn_out, attn_ln_g_ref[...], attn_ln_b_ref[...], eps)

    # ---- feed-forward ----------------------------------------------------------
    ff = (jnp.dot(h.astype(cdt), w1_ref[...], preferred_element_type=f32)
          + b1_ref[...])
    # TODO(synk): HF/PyTorch BERT uses erf-based gelu; tanh approximation kept here.
    ff = jax.nn.gelu(ff)
    ff = (jnp.dot(ff.astype(cdt), w2_ref[...], preferred_element_type=f32)
          + b2_ref[...])
    h = _layernorm(h + ff, ffn_ln_g_ref[...], ffn_ln_b_ref[...], eps)   # (BS, D)

    # ---- pooler: tanh(Linear(hidden[:, 0])) ------------------------------------
    # select the [CLS] row of every sequence with a tiny selection matmul
    sel = (lax.broadcasted_iota(jnp.int32, (B, BS), 1)
           == S * lax.broadcasted_iota(jnp.int32, (B, BS), 0)).astype(f32)
    cls = jnp.dot(sel, h, preferred_element_type=f32)            # (B, D)
    pooled = jnp.tanh(jnp.dot(cls.astype(cdt), wp_ref[...],
                              preferred_element_type=f32) + bp_ref[...])

    # ---- BERT_SPC head: dropout(pooled) is identity at inference ---------------
    # classifier weight is zero-padded to 128 lanes -> lane-dense unmasked store
    logits_ref[...] = (jnp.dot(pooled.astype(cdt), wd_ref[...],
                               preferred_element_type=f32) + bd_ref[...])


# ----------------------------------------------------------------------------
# Params + forward wrapper
# ----------------------------------------------------------------------------

def init_params(key, *, vocab, type_vocab, max_pos, D, H, ffn, P):
    ks = iter(jax.random.split(key, 32))
    n = lambda shape, s=0.02: (s * jax.random.normal(next(ks), shape)).astype(jnp.float32)
    z = lambda shape: jnp.zeros(shape, jnp.float32)
    o = lambda shape: jnp.ones(shape, jnp.float32)
    return dict(
        word_emb=n((vocab, D)), seg_emb=n((type_vocab, D)), pos_emb=n((max_pos, D)),
        emb_ln_g=o((D,)), emb_ln_b=z((D,)),
        wq=n((D, D)), bq=z((D,)), wk=n((D, D)), bk=z((D,)),
        wv=n((D, D)), bv=z((D,)), wo=n((D, D)), bo=z((D,)),
        attn_ln_g=o((D,)), attn_ln_b=z((D,)),
        w1=n((D, ffn)), b1=z((ffn,)), w2=n((ffn, D)), b2=z((D,)),
        ffn_ln_g=o((D,)), ffn_ln_b=z((D,)),
        wp=n((D, D)), bp=z((D,)),
        w_dense=n((D, P)), b_dense=z((P,)),
    )


def bert_spc_forward(params, ids, segs, *, H):
    B, S = ids.shape
    D = params["word_emb"].shape[1]
    FFN = params["w1"].shape[1]
    P = params["w_dense"].shape[1]
    VOCAB = params["word_emb"].shape[0]
    TYPE_VOCAB = params["seg_emb"].shape[0]
    P_PAD = 128                      # lane-dense logits output, sliced to P outside
    cdt = jnp.bfloat16               # matmul operand dtype (fp32 accumulation)
    dh = D // H

    # Fused QKV weight (one matmul instead of three) and lane-padded classifier.
    wqkv = jnp.concatenate([params["wq"], params["wk"], params["wv"]], axis=1).astype(cdt)
    bqkv = jnp.concatenate([params["bq"], params["bk"], params["bv"]]).reshape(1, 3 * D)
    wd = jnp.pad(params["w_dense"], ((0, 0), (0, P_PAD - P))).astype(cdt)
    bd = jnp.pad(params["b_dense"], (0, P_PAD - P)).reshape(1, P_PAD)

    row = lambda v: v.reshape(1, -1)     # biases / LN params as (1, N) fp32

    inputs = (
        ids.reshape(B * S, 1).astype(jnp.int32),
        segs.reshape(B * S, 1).astype(jnp.int32),
        params["word_emb"], params["seg_emb"], params["pos_emb"],
        row(params["emb_ln_g"]), row(params["emb_ln_b"]),
        wqkv, bqkv,
        params["wo"].astype(cdt), row(params["bo"]),
        row(params["attn_ln_g"]), row(params["attn_ln_b"]),
        params["w1"].astype(cdt), row(params["b1"]),
        params["w2"].astype(cdt), row(params["b2"]),
        row(params["ffn_ln_g"]), row(params["ffn_ln_b"]),
        params["wp"].astype(cdt), row(params["bp"]),
        wd, bd,
    )

    flops = int(
        2 * B * S * D * (VOCAB + TYPE_VOCAB)   # one-hot embedding matmuls
        + 2 * B * S * D * (3 * D)              # fused QKV
        + B * H * 4 * S * S * dh               # scores + context
        + 2 * B * S * D * D                    # output projection
        + 4 * B * S * D * FFN                  # FFN
        + 2 * B * D * D                        # pooler
        + 2 * B * D * P_PAD                    # classifier
    )
    transcendentals = int(B * H * S * S + B * S * FFN + B * D + 3 * B * S + B * H * S)
    bytes_accessed = int(sum(x.size * x.dtype.itemsize for x in inputs)
                         + B * P_PAD * 4)

    out = pl.pallas_call(
        functools.partial(_bert_spc_kernel, B=B, S=S, D=D, H=H, eps=1e-12),
        out_shape=jax.ShapeDtypeStruct((B, P_PAD), jnp.float32),
        in_specs=[_VMEM] * len(inputs),
        out_specs=_VMEM,
        cost_estimate=pl.CostEstimate(flops=flops,
                                      transcendentals=transcendentals,
                                      bytes_accessed=bytes_accessed),
    )(*inputs)
    return out[:, :P]


# ----------------------------------------------------------------------------
# Driver
# ----------------------------------------------------------------------------

if __name__ == "__main__":
    B, S = 2, 8
    D, H = 48, 3          # bert_dim=48, nhead=3 -> head_dim=16
    FFN = 4 * D
    P = 3                 # polarities_dim
    VOCAB, TYPE_VOCAB, MAX_POS = 30, 2, 16

    key = jax.random.PRNGKey(0)
    k_par, k_ids, k_seg = jax.random.split(key, 3)

    params = init_params(k_par, vocab=VOCAB, type_vocab=TYPE_VOCAB, max_pos=MAX_POS,
                         D=D, H=H, ffn=FFN, P=P)
    text_spc_bert_indices = jax.random.randint(k_ids, (B, S), 0, VOCAB, dtype=jnp.int32)
    bert_segments_ids = jax.random.randint(k_seg, (B, S), 0, TYPE_VOCAB, dtype=jnp.int32)

    fwd = jax.jit(functools.partial(bert_spc_forward, H=H))
    logits = fwd(params, text_spc_bert_indices, bert_segments_ids)
    logits = jax.block_until_ready(logits)
    assert logits.shape == (B, P) and logits.dtype == jnp.float32
    print("KERNEL_OK")
</pallas_src>

<mosaic_0001>
module attributes {stable_mosaic.version = 11 : i64} {
  func.func @_bert_spc_kernel(%arg0: memref<16x1xi32, #tpu.memory_space<vmem>>, %arg1: memref<16x1xi32, #tpu.memory_space<vmem>>, %arg2: memref<30x48xf32, #tpu.memory_space<vmem>>, %arg3: memref<2x48xf32, #tpu.memory_space<vmem>>, %arg4: memref<16x48xf32, #tpu.memory_space<vmem>>, %arg5: memref<1x48xf32, #tpu.memory_space<vmem>>, %arg6: memref<1x48xf32, #tpu.memory_space<vmem>>, %arg7: memref<48x144xbf16, #tpu.memory_space<vmem>>, %arg8: memref<1x144xf32, #tpu.memory_space<vmem>>, %arg9: memref<48x48xbf16, #tpu.memory_space<vmem>>, %arg10: memref<1x48xf32, #tpu.memory_space<vmem>>, %arg11: memref<1x48xf32, #tpu.memory_space<vmem>>, %arg12: memref<1x48xf32, #tpu.memory_space<vmem>>, %arg13: memref<48x192xbf16, #tpu.memory_space<vmem>>, %arg14: memref<1x192xf32, #tpu.memory_space<vmem>>, %arg15: memref<192x48xbf16, #tpu.memory_space<vmem>>, %arg16: memref<1x48xf32, #tpu.memory_space<vmem>>, %arg17: memref<1x48xf32, #tpu.memory_space<vmem>>, %arg18: memref<1x48xf32, #tpu.memory_space<vmem>>, %arg19: memref<48x48xbf16, #tpu.memory_space<vmem>>, %arg20: memref<1x48xf32, #tpu.memory_space<vmem>>, %arg21: memref<48x128xbf16, #tpu.memory_space<vmem>>, %arg22: memref<1x128xf32, #tpu.memory_space<vmem>>, %arg23: memref<2x128xf32, #tpu.memory_space<vmem>>) attributes {dimension_semantics = [], scalar_prefetch = 0 : i64, scratch_operands = 0 : i64, tpu.core_type = #tpu.core_type<tc>} {
    %c0 = arith.constant 0 : index
    %c0_0 = arith.constant 0 : index
    %0 = vector.load %arg0[%c0, %c0_0] : memref<16x1xi32, #tpu.memory_space<vmem>>, vector<16x1xi32>
    %c0_1 = arith.constant 0 : index
    %c0_2 = arith.constant 0 : index
    %1 = vector.load %arg1[%c0_1, %c0_2] : memref<16x1xi32, #tpu.memory_space<vmem>>, vector<16x1xi32>
    %2 = tpu.iota {dimensions = array<i32: 1>} : vector<16x30xi32>
    %3 = vector.broadcast %0 : vector<16x1xi32> to vector<16x30xi32>
    %4 = arith.cmpi eq, %3, %2 : vector<16x30xi32>
    %5 = arith.extui %4 : vector<16x30xi1> to vector<16x30xi32>
    %6 = arith.sitofp %5 : vector<16x30xi32> to vector<16x30xf32>
    %7 = tpu.iota {dimensions = array<i32: 1>} : vector<16x2xi32>
    %8 = vector.broadcast %1 : vector<16x1xi32> to vector<16x2xi32>
    %9 = arith.cmpi eq, %8, %7 : vector<16x2xi32>
    %10 = arith.extui %9 : vector<16x2xi1> to vector<16x2xi32>
    %11 = arith.sitofp %10 : vector<16x2xi32> to vector<16x2xf32>
    %c0_3 = arith.constant 0 : index
    %c0_4 = arith.constant 0 : index
    %12 = vector.load %arg2[%c0_3, %c0_4] : memref<30x48xf32, #tpu.memory_space<vmem>>, vector<30x48xf32>
    %cst = arith.constant dense<0.000000e+00> : vector<16x48xf32>
    %13 = tpu.matmul %6, %12, %cst {dimension_numbers = #tpu.dot_dimension_numbers<[1], [0], [0], [1], [0, 0, 1, 1], [], []>} : vector<16x30xf32>, vector<30x48xf32>, vector<16x48xf32> -> vector<16x48xf32>
    %c0_5 = arith.constant 0 : index
    %c0_6 = arith.constant 0 : index
    %14 = vector.load %arg3[%c0_5, %c0_6] : memref<2x48xf32, #tpu.memory_space<vmem>>, vector<2x48xf32>
    %cst_7 = arith.constant dense<0.000000e+00> : vector<16x48xf32>
    %15 = tpu.matmul %11, %14, %cst_7 {dimension_numbers = #tpu.dot_dimension_numbers<[1], [0], [0], [1], [0, 0, 1, 1], [], []>} : vector<16x2xf32>, vector<2x48xf32>, vector<16x48xf32> -> vector<16x48xf32>
    %16 = arith.addf %13, %15 : vector<16x48xf32>
    %c0_8 = arith.constant 0 : index
    %c0_9 = arith.constant 0 : index
    %17 = vector.load %arg4[%c0_8, %c0_9] : memref<16x48xf32, #tpu.memory_space<vmem>>, vector<8x48xf32>
    %18 = tpu.concatenate %17, %17 in 0 : vector<8x48xf32>, vector<8x48xf32> -> vector<16x48xf32>
    %19 = arith.addf %16, %18 : vector<16x48xf32>
    %c0_10 = arith.constant 0 : index
    %c0_11 = arith.constant 0 : index
    %20 = vector.load %arg5[%c0_10, %c0_11] : memref<1x48xf32, #tpu.memory_space<vmem>>, vector<1x48xf32>
    %c0_12 = arith.constant 0 : index
    %c0_13 = arith.constant 0 : index
    %21 = vector.load %arg6[%c0_12, %c0_13] : memref<1x48xf32, #tpu.memory_space<vmem>>, vector<1x48xf32>
    %cst_14 = arith.constant dense<0.000000e+00> : vector<16xf32>
    %22 = vector.multi_reduction <add>, %19, %cst_14 [1] : vector<16x48xf32> to vector<16xf32>
    %23 = vector.shape_cast %22 : vector<16xf32> to vector<16x1xf32>
    %cst_15 = arith.constant 4.800000e+01 : f32
    %24 = vector.broadcast %cst_15 : f32 to vector<16x1xf32>
    %25 = arith.divf %23, %24 : vector<16x1xf32>
    %26 = vector.broadcast %25 : vector<16x1xf32> to vector<16x48xf32>
    %27 = arith.subf %19, %26 : vector<16x48xf32>
    %28 = arith.mulf %27, %27 : vector<16x48xf32>
    %cst_16 = arith.constant dense<0.000000e+00> : vector<16xf32>
    %29 = vector.multi_reduction <add>, %28, %cst_16 [1] : vector<16x48xf32> to vector<16xf32>
    %30 = vector.shape_cast %29 : vector<16xf32> to vector<16x1xf32>
    %cst_17 = arith.constant 4.800000e+01 : f32
    %31 = vector.broadcast %cst_17 : f32 to vector<16x1xf32>
    %32 = arith.divf %30, %31 : vector<16x1xf32>
    %33 = vector.broadcast %25 : vector<16x1xf32> to vector<16x48xf32>
    %34 = arith.subf %19, %33 : vector<16x48xf32>
    %cst_18 = arith.constant 9.99999996E-13 : f32
    %35 = vector.broadcast %cst_18 : f32 to vector<16x1xf32>
    %36 = arith.addf %32, %35 : vector<16x1xf32>
    %37 = math.rsqrt %36 : vector<16x1xf32>
    %38 = vector.broadcast %37 : vector<16x1xf32> to vector<16x48xf32>
    %39 = arith.mulf %34, %38 : vector<16x48xf32>
    %40 = vector.broadcast %20 : vector<1x48xf32> to vector<16x48xf32>
    %41 = arith.mulf %39, %40 : vector<16x48xf32>
    %42 = vector.broadcast %21 : vector<1x48xf32> to vector<16x48xf32>
    %43 = arith.addf %41, %42 : vector<16x48xf32>
    %44 = arith.truncf %43 : vector<16x48xf32> to vector<16x48xbf16>
    %c0_19 = arith.constant 0 : index
    %c0_20 = arith.constant 0 : index
    %45 = vector.load %arg7[%c0_19, %c0_20] : memref<48x144xbf16, #tpu.memory_space<vmem>>, vector<48x144xbf16>
    %cst_21 = arith.constant dense<0.000000e+00> : vector<16x144xf32>
    %46 = tpu.matmul %44, %45, %cst_21 {dimension_numbers = #tpu.dot_dimension_numbers<[1], [0], [0], [1], [0, 0, 1, 1], [], []>} : vector<16x48xbf16>, vector<48x144xbf16>, vector<16x144xf32> -> vector<16x144xf32>
    %c0_22 = arith.constant 0 : index
    %c0_23 = arith.constant 0 : index
    %47 = vector.load %arg8[%c0_22, %c0_23] : memref<1x144xf32, #tpu.memory_space<vmem>>, vector<1x144xf32>
    %48 = vector.broadcast %47 : vector<1x144xf32> to vector<16x144xf32>
    %49 = arith.addf %46, %48 : vector<16x144xf32>
    %cst_24 = arith.constant 0.000000e+00 : f32
    %50 = vector.broadcast %cst_24 : f32 to vector<8x48xf32>
    %51 = vector.extract_strided_slice %49 {offsets = [0, 0], sizes = [8, 16], strides = [1, 1]} : vector<16x144xf32> to vector<8x16xf32>
    %52 = arith.truncf %51 : vector<8x16xf32> to vector<8x16xbf16>
    %53 = vector.extract_strided_slice %49 {offsets = [0, 48], sizes = [8, 16], strides = [1, 1]} : vector<16x144xf32> to vector<8x16xf32>
    %54 = arith.truncf %53 : vector<8x16xf32> to vector<8x16xbf16>
    %55 = vector.extract_strided_slice %49 {offsets = [0, 96], sizes = [8, 16], strides = [1, 1]} : vector<16x144xf32> to vector<8x16xf32>
    %56 = arith.truncf %55 : vector<8x16xf32> to vector<8x16xbf16>
    %cst_25 = arith.constant dense<0.000000e+00> : vector<8x8xf32>
    %57 = tpu.matmul %52, %54, %cst_25 {dimension_numbers = #tpu.dot_dimension_numbers<[1], [1], [0], [0], [0, 0, 1, 0], [], []>} : vector<8x16xbf16>, vector<8x16xbf16>, vector<8x8xf32> -> vector<8x8xf32>
    %cst_26 = arith.constant 2.500000e-01 : f32
    %58 = vector.broadcast %cst_26 : f32 to vector<8x8xf32>
    %59 = arith.mulf %57, %58 : vector<8x8xf32>
    %cst_27 = arith.constant dense<0xFF800000> : vector<8xf32>
    %60 = vector.multi_reduction <maximumf>, %59, %cst_27 [1] : vector<8x8xf32> to vector<8xf32>
    %61 = vector.shape_cast %60 : vector<8xf32> to vector<8x1xf32>
    %62 = vector.broadcast %61 : vector<8x1xf32> to vector<8x8xf32>
    %63 = arith.subf %59, %62 : vector<8x8xf32>
    %64 = math.exp %63 : vector<8x8xf32>
    %cst_28 = arith.constant dense<0.000000e+00> : vector<8xf32>
    %65 = vector.multi_reduction <add>, %64, %cst_28 [1] : vector<8x8xf32> to vector<8xf32>
    %66 = vector.shape_cast %65 : vector<8xf32> to vector<8x1xf32>
    %67 = tpu.reciprocal %66 {approx = true} : vector<8x1xf32> -> vector<8x1xf32>
    %68 = vector.broadcast %67 : vector<8x1xf32> to vector<8x8xf32>
    %69 = arith.mulf %64, %68 : vector<8x8xf32>
    %70 = arith.truncf %69 : vector<8x8xf32> to vector<8x8xbf16>
    %cst_29 = arith.constant dense<0.000000e+00> : vector<8x16xf32>
    %71 = tpu.matmul %70, %56, %cst_29 {dimension_numbers = #tpu.dot_dimension_numbers<[1], [0], [0], [1], [0, 0, 1, 1], [], []>} : vector<8x8xbf16>, vector<8x16xbf16>, vector<8x16xf32> -> vector<8x16xf32>
    %72 = arith.truncf %71 : vector<8x16xf32> to vector<8x16xbf16>
    %c0_30 = arith.constant 0 : index
    %c0_31 = arith.constant 0 : index
    %73 = vector.load %arg9[%c0_30, %c0_31] : memref<48x48xbf16, #tpu.memory_space<vmem>>, vector<16x48xbf16>
    %cst_32 = arith.constant dense<0.000000e+00> : vector<8x48xf32>
    %74 = tpu.matmul %72, %73, %cst_32 {dimension_numbers = #tpu.dot_dimension_numbers<[1], [0], [0], [1], [0, 0, 1, 1], [], []>} : vector<8x16xbf16>, vector<16x48xbf16>, vector<8x48xf32> -> vector<8x48xf32>
    %75 = arith.addf %50, %74 : vector<8x48xf32>
    %76 = vector.extract_strided_slice %49 {offsets = [0, 16], sizes = [8, 16], strides = [1, 1]} : vector<16x144xf32> to vector<8x16xf32>
    %77 = arith.truncf %76 : vector<8x16xf32> to vector<8x16xbf16>
    %78 = vector.extract_strided_slice %49 {offsets = [0, 64], sizes = [8, 16], strides = [1, 1]} : vector<16x144xf32> to vector<8x16xf32>
    %79 = arith.truncf %78 : vector<8x16xf32> to vector<8x16xbf16>
    %80 = vector.extract_strided_slice %49 {offsets = [0, 112], sizes = [8, 16], strides = [1, 1]} : vector<16x144xf32> to vector<8x16xf32>
    %81 = arith.truncf %80 : vector<8x16xf32> to vector<8x16xbf16>
    %cst_33 = arith.constant dense<0.000000e+00> : vector<8x8xf32>
    %82 = tpu.matmul %77, %79, %cst_33 {dimension_numbers = #tpu.dot_dimension_numbers<[1], [1], [0], [0], [0, 0, 1, 0], [], []>} : vector<8x16xbf16>, vector<8x16xbf16>, vector<8x8xf32> -> vector<8x8xf32>
    %cst_34 = arith.constant 2.500000e-01 : f32
    %83 = vector.broadcast %cst_34 : f32 to vector<8x8xf32>
    %84 = arith.mulf %82, %83 : vector<8x8xf32>
    %cst_35 = arith.constant dense<0xFF800000> : vector<8xf32>
    %85 = vector.multi_reduction <maximumf>, %84, %cst_35 [1] : vector<8x8xf32> to vector<8xf32>
    %86 = vector.shape_cast %85 : vector<8xf32> to vector<8x1xf32>
    %87 = vector.broadcast %86 : vector<8x1xf32> to vector<8x8xf32>
    %88 = arith.subf %84, %87 : vector<8x8xf32>
    %89 = math.exp %88 : vector<8x8xf32>
    %cst_36 = arith.constant dense<0.000000e+00> : vector<8xf32>
    %90 = vector.multi_reduction <add>, %89, %cst_36 [1] : vector<8x8xf32> to vector<8xf32>
    %91 = vector.shape_cast %90 : vector<8xf32> to vector<8x1xf32>
    %92 = tpu.reciprocal %91 {approx = true} : vector<8x1xf32> -> vector<8x1xf32>
    %93 = vector.broadcast %92 : vector<8x1xf32> to vector<8x8xf32>
    %94 = arith.mulf %89, %93 : vector<8x8xf32>
    %95 = arith.truncf %94 : vector<8x8xf32> to vector<8x8xbf16>
    %cst_37 = arith.constant dense<0.000000e+00> : vector<8x16xf32>
    %96 = tpu.matmul %95, %81, %cst_37 {dimension_numbers = #tpu.dot_dimension_numbers<[1], [0], [0], [1], [0, 0, 1, 1], [], []>} : vector<8x8xbf16>, vector<8x16xbf16>, vector<8x16xf32> -> vector<8x16xf32>
    %97 = arith.truncf %96 : vector<8x16xf32> to vector<8x16xbf16>
    %c16 = arith.constant 16 : index
    %c0_38 = arith.constant 0 : index
    %98 = vector.load %arg9[%c16, %c0_38] : memref<48x48xbf16, #tpu.memory_space<vmem>>, vector<16x48xbf16>
    %cst_39 = arith.constant dense<0.000000e+00> : vector<8x48xf32>
    %99 = tpu.matmul %97, %98, %cst_39 {dimension_numbers = #tpu.dot_dimension_numbers<[1], [0], [0], [1], [0, 0, 1, 1], [], []>} : vector<8x16xbf16>, vector<16x48xbf16>, vector<8x48xf32> -> vector<8x48xf32>
    %100 = arith.addf %75, %99 : vector<8x48xf32>
    %101 = vector.extract_strided_slice %49 {offsets = [0, 32], sizes = [8, 16], strides = [1, 1]} : vector<16x144xf32> to vector<8x16xf32>
    %102 = arith.truncf %101 : vector<8x16xf32> to vector<8x16xbf16>
    %103 = vector.extract_strided_slice %49 {offsets = [0, 80], sizes = [8, 16], strides = [1, 1]} : vector<16x144xf32> to vector<8x16xf32>
    %104 = arith.truncf %103 : vector<8x16xf32> to vector<8x16xbf16>
    %105 = vector.extract_strided_slice %49 {offsets = [0, 128], sizes = [8, 16], strides = [1, 1]} : vector<16x144xf32> to vector<8x16xf32>
    %106 = arith.truncf %105 : vector<8x16xf32> to vector<8x16xbf16>
    %cst_40 = arith.constant dense<0.000000e+00> : vector<8x8xf32>
    %107 = tpu.matmul %102, %104, %cst_40 {dimension_numbers = #tpu.dot_dimension_numbers<[1], [1], [0], [0], [0, 0, 1, 0], [], []>} : vector<8x16xbf16>, vector<8x16xbf16>, vector<8x8xf32> -> vector<8x8xf32>
    %cst_41 = arith.constant 2.500000e-01 : f32
    %108 = vector.broadcast %cst_41 : f32 to vector<8x8xf32>
    %109 = arith.mulf %107, %108 : vector<8x8xf32>
    %cst_42 = arith.constant dense<0xFF800000> : vector<8xf32>
    %110 = vector.multi_reduction <maximumf>, %109, %cst_42 [1] : vector<8x8xf32> to vector<8xf32>
    %111 = vector.shape_cast %110 : vector<8xf32> to vector<8x1xf32>
    %112 = vector.broadcast %111 : vector<8x1xf32> to vector<8x8xf32>
    %113 = arith.subf %109, %112 : vector<8x8xf32>
    %114 = math.exp %113 : vector<8x8xf32>
    %cst_43 = arith.constant dense<0.000000e+00> : vector<8xf32>
    %115 = vector.multi_reduction <add>, %114, %cst_43 [1] : vector<8x8xf32> to vector<8xf32>
    %116 = vector.shape_cast %115 : vector<8xf32> to vector<8x1xf32>
    %117 = tpu.reciprocal %116 {approx = true} : vector<8x1xf32> -> vector<8x1xf32>
    %118 = vector.broadcast %117 : vector<8x1xf32> to vector<8x8xf32>
    %119 = arith.mulf %114, %118 : vector<8x8xf32>
    %120 = arith.truncf %119 : vector<8x8xf32> to vector<8x8xbf16>
    %cst_44 = arith.constant dense<0.000000e+00> : vector<8x16xf32>
    %121 = tpu.matmul %120, %106, %cst_44 {dimension_numbers = #tpu.dot_dimension_numbers<[1], [0], [0], [1], [0, 0, 1, 1], [], []>} : vector<8x8xbf16>, vector<8x16xbf16>, vector<8x16xf32> -> vector<8x16xf32>
    %122 = arith.truncf %121 : vector<8x16xf32> to vector<8x16xbf16>
    %c32 = arith.constant 32 : index
    %c0_45 = arith.constant 0 : index
    %123 = vector.load %arg9[%c32, %c0_45] : memref<48x48xbf16, #tpu.memory_space<vmem>>, vector<16x48xbf16>
    %cst_46 = arith.constant dense<0.000000e+00> : vector<8x48xf32>
    %124 = tpu.matmul %122, %123, %cst_46 {dimension_numbers = #tpu.dot_dimension_numbers<[1], [0], [0], [1], [0, 0, 1, 1], [], []>} : vector<8x16xbf16>, vector<16x48xbf16>, vector<8x48xf32> -> vector<8x48xf32>
    %125 = arith.addf %100, %124 : vector<8x48xf32>
    %cst_47 = arith.constant 0.000000e+00 : f32
    %126 = vector.broadcast %cst_47 : f32 to vector<8x48xf32>
    %127 = vector.extract_strided_slice %49 {offsets = [8, 0], sizes = [8, 16], strides = [1, 1]} : vector<16x144xf32> to vector<8x16xf32>
    %128 = arith.truncf %127 : vector<8x16xf32> to vector<8x16xbf16>
    %129 = vector.extract_strided_slice %49 {offsets = [8, 48], sizes = [8, 16], strides = [1, 1]} : vector<16x144xf32> to vector<8x16xf32>
    %130 = arith.truncf %129 : vector<8x16xf32> to vector<8x16xbf16>
    %131 = vector.extract_strided_slice %49 {offsets = [8, 96], sizes = [8, 16], strides = [1, 1]} : vector<16x144xf32> to vector<8x16xf32>
    %132 = arith.truncf %131 : vector<8x16xf32> to vector<8x16xbf16>
    %cst_48 = arith.constant dense<0.000000e+00> : vector<8x8xf32>
    %133 = tpu.matmul %128, %130, %cst_48 {dimension_numbers = #tpu.dot_dimension_numbers<[1], [1], [0], [0], [0, 0, 1, 0], [], []>} : vector<8x16xbf16>, vector<8x16xbf16>, vector<8x8xf32> -> vector<8x8xf32>
    %cst_49 = arith.constant 2.500000e-01 : f32
    %134 = vector.broadcast %cst_49 : f32 to vector<8x8xf32>
    %135 = arith.mulf %133, %134 : vector<8x8xf32>
    %cst_50 = arith.constant dense<0xFF800000> : vector<8xf32>
    %136 = vector.multi_reduction <maximumf>, %135, %cst_50 [1] : vector<8x8xf32> to vector<8xf32>
    %137 = vector.shape_cast %136 : vector<8xf32> to vector<8x1xf32>
    %138 = vector.broadcast %137 : vector<8x1xf32> to vector<8x8xf32>
    %139 = arith.subf %135, %138 : vector<8x8xf32>
    %140 = math.exp %139 : vector<8x8xf32>
    %cst_51 = arith.constant dense<0.000000e+00> : vector<8xf32>
    %141 = vector.multi_reduction <add>, %140, %cst_51 [1] : vector<8x8xf32> to vector<8xf32>
    %142 = vector.shape_cast %141 : vector<8xf32> to vector<8x1xf32>
    %143 = tpu.reciprocal %142 {approx = true} : vector<8x1xf32> -> vector<8x1xf32>
    %144 = vector.broadcast %143 : vector<8x1xf32> to vector<8x8xf32>
    %145 = arith.mulf %140, %144 : vector<8x8xf32>
    %146 = arith.truncf %145 : vector<8x8xf32> to vector<8x8xbf16>
    %cst_52 = arith.constant dense<0.000000e+00> : vector<8x16xf32>
    %147 = tpu.matmul %146, %132, %cst_52 {dimension_numbers = #tpu.dot_dimension_numbers<[1], [0], [0], [1], [0, 0, 1, 1], [], []>} : vector<8x8xbf16>, vector<8x16xbf16>, vector<8x16xf32> -> vector<8x16xf32>
    %148 = arith.truncf %147 : vector<8x16xf32> to vector<8x16xbf16>
    %c0_53 = arith.constant 0 : index
    %c0_54 = arith.constant 0 : index
    %149 = vector.load %arg9[%c0_53, %c0_54] : memref<48x48xbf16, #tpu.memory_space<vmem>>, vector<16x48xbf16>
    %cst_55 = arith.constant dense<0.000000e+00> : vector<8x48xf32>
    %150 = tpu.matmul %148, %149, %cst_55 {dimension_numbers = #tpu.dot_dimension_numbers<[1], [0], [0], [1], [0, 0, 1, 1], [], []>} : vector<8x16xbf16>, vector<16x48xbf16>, vector<8x48xf32> -> vector<8x48xf32>
    %151 = arith.addf %126, %150 : vector<8x48xf32>
    %152 = vector.extract_strided_slice %49 {offsets = [8, 16], sizes = [8, 16], strides = [1, 1]} : vector<16x144xf32> to vector<8x16xf32>
    %153 = arith.truncf %152 : vector<8x16xf32> to vector<8x16xbf16>
    %154 = vector.extract_strided_slice %49 {offsets = [8, 64], sizes = [8, 16], strides = [1, 1]} : vector<16x144xf32> to vector<8x16xf32>
    %155 = arith.truncf %154 : vector<8x16xf32> to vector<8x16xbf16>
    %156 = vector.extract_strided_slice %49 {offsets = [8, 112], sizes = [8, 16], strides = [1, 1]} : vector<16x144xf32> to vector<8x16xf32>
    %157 = arith.truncf %156 : vector<8x16xf32> to vector<8x16xbf16>
    %cst_56 = arith.constant dense<0.000000e+00> : vector<8x8xf32>
    %158 = tpu.matmul %153, %155, %cst_56 {dimension_numbers = #tpu.dot_dimension_numbers<[1], [1], [0], [0], [0, 0, 1, 0], [], []>} : vector<8x16xbf16>, vector<8x16xbf16>, vector<8x8xf32> -> vector<8x8xf32>
    %cst_57 = arith.constant 2.500000e-01 : f32
    %159 = vector.broadcast %cst_57 : f32 to vector<8x8xf32>
    %160 = arith.mulf %158, %159 : vector<8x8xf32>
    %cst_58 = arith.constant dense<0xFF800000> : vector<8xf32>
    %161 = vector.multi_reduction <maximumf>, %160, %cst_58 [1] : vector<8x8xf32> to vector<8xf32>
    %162 = vector.shape_cast %161 : vector<8xf32> to vector<8x1xf32>
    %163 = vector.broadcast %162 : vector<8x1xf32> to vector<8x8xf32>
    %164 = arith.subf %160, %163 : vector<8x8xf32>
    %165 = math.exp %164 : vector<8x8xf32>
    %cst_59 = arith.constant dense<0.000000e+00> : vector<8xf32>
    %166 = vector.multi_reduction <add>, %165, %cst_59 [1] : vector<8x8xf32> to vector<8xf32>
    %167 = vector.shape_cast %166 : vector<8xf32> to vector<8x1xf32>
    %168 = tpu.reciprocal %167 {approx = true} : vector<8x1xf32> -> vector<8x1xf32>
    %169 = vector.broadcast %168 : vector<8x1xf32> to vector<8x8xf32>
    %170 = arith.mulf %165, %169 : vector<8x8xf32>
    %171 = arith.truncf %170 : vector<8x8xf32> to vector<8x8xbf16>
    %cst_60 = arith.constant dense<0.000000e+00> : vector<8x16xf32>
    %172 = tpu.matmul %171, %157, %cst_60 {dimension_numbers = #tpu.dot_dimension_numbers<[1], [0], [0], [1], [0, 0, 1, 1], [], []>} : vector<8x8xbf16>, vector<8x16xbf16>, vector<8x16xf32> -> vector<8x16xf32>
    %173 = arith.truncf %172 : vector<8x16xf32> to vector<8x16xbf16>
    %c16_61 = arith.constant 16 : index
    %c0_62 = arith.constant 0 : index
    %174 = vector.load %arg9[%c16_61, %c0_62] : memref<48x48xbf16, #tpu.memory_space<vmem>>, vector<16x48xbf16>
    %cst_63 = arith.constant dense<0.000000e+00> : vector<8x48xf32>
    %175 = tpu.matmul %173, %174, %cst_63 {dimension_numbers = #tpu.dot_dimension_numbers<[1], [0], [0], [1], [0, 0, 1, 1], [], []>} : vector<8x16xbf16>, vector<16x48xbf16>, vector<8x48xf32> -> vector<8x48xf32>
    %176 = arith.addf %151, %175 : vector<8x48xf32>
    %177 = vector.extract_strided_slice %49 {offsets = [8, 32], sizes = [8, 16], strides = [1, 1]} : vector<16x144xf32> to vector<8x16xf32>
    %178 = arith.truncf %177 : vector<8x16xf32> to vector<8x16xbf16>
    %179 = vector.extract_strided_slice %49 {offsets = [8, 80], sizes = [8, 16], strides = [1, 1]} : vector<16x144xf32> to vector<8x16xf32>
    %180 = arith.truncf %179 : vector<8x16xf32> to vector<8x16xbf16>
    %181 = vector.extract_strided_slice %49 {offsets = [8, 128], sizes = [8, 16], strides = [1, 1]} : vector<16x144xf32> to vector<8x16xf32>
    %182 = arith.truncf %181 : vector<8x16xf32> to vector<8x16xbf16>
    %cst_64 = arith.constant dense<0.000000e+00> : vector<8x8xf32>
    %183 = tpu.matmul %178, %180, %cst_64 {dimension_numbers = #tpu.dot_dimension_numbers<[1], [1], [0], [0], [0, 0, 1, 0], [], []>} : vector<8x16xbf16>, vector<8x16xbf16>, vector<8x8xf32> -> vector<8x8xf32>
    %cst_65 = arith.constant 2.500000e-01 : f32
    %184 = vector.broadcast %cst_65 : f32 to vector<8x8xf32>
    %185 = arith.mulf %183, %184 : vector<8x8xf32>
    %cst_66 = arith.constant dense<0xFF800000> : vector<8xf32>
    %186 = vector.multi_reduction <maximumf>, %185, %cst_66 [1] : vector<8x8xf32> to vector<8xf32>
    %187 = vector.shape_cast %186 : vector<8xf32> to vector<8x1xf32>
    %188 = vector.broadcast %187 : vector<8x1xf32> to vector<8x8xf32>
    %189 = arith.subf %185, %188 : vector<8x8xf32>
    %190 = math.exp %189 : vector<8x8xf32>
    %cst_67 = arith.constant dense<0.000000e+00> : vector<8xf32>
    %191 = vector.multi_reduction <add>, %190, %cst_67 [1] : vector<8x8xf32> to vector<8xf32>
    %192 = vector.shape_cast %191 : vector<8xf32> to vector<8x1xf32>
    %193 = tpu.reciprocal %192 {approx = true} : vector<8x1xf32> -> vector<8x1xf32>
    %194 = vector.broadcast %193 : vector<8x1xf32> to vector<8x8xf32>
    %195 = arith.mulf %190, %194 : vector<8x8xf32>
    %196 = arith.truncf %195 : vector<8x8xf32> to vector<8x8xbf16>
    %cst_68 = arith.constant dense<0.000000e+00> : vector<8x16xf32>
    %197 = tpu.matmul %196, %182, %cst_68 {dimension_numbers = #tpu.dot_dimension_numbers<[1], [0], [0], [1], [0, 0, 1, 1], [], []>} : vector<8x8xbf16>, vector<8x16xbf16>, vector<8x16xf32> -> vector<8x16xf32>
    %198 = arith.truncf %197 : vector<8x16xf32> to vector<8x16xbf16>
    %c32_69 = arith.constant 32 : index
    %c0_70 = arith.constant 0 : index
    %199 = vector.load %arg9[%c32_69, %c0_70] : memref<48x48xbf16, #tpu.memory_space<vmem>>, vector<16x48xbf16>
    %cst_71 = arith.constant dense<0.000000e+00> : vector<8x48xf32>
    %200 = tpu.matmul %198, %199, %cst_71 {dimension_numbers = #tpu.dot_dimension_numbers<[1], [0], [0], [1], [0, 0, 1, 1], [], []>} : vector<8x16xbf16>, vector<16x48xbf16>, vector<8x48xf32> -> vector<8x48xf32>
    %201 = arith.addf %176, %200 : vector<8x48xf32>
    %202 = tpu.concatenate %125, %201 in 0 : vector<8x48xf32>, vector<8x48xf32> -> vector<16x48xf32>
    %c0_72 = arith.constant 0 : index
    %c0_73 = arith.constant 0 : index
    %203 = vector.load %arg10[%c0_72, %c0_73] : memref<1x48xf32, #tpu.memory_space<vmem>>, vector<1x48xf32>
    %204 = vector.broadcast %203 : vector<1x48xf32> to vector<16x48xf32>
    %205 = arith.addf %202, %204 : vector<16x48xf32>
    %206 = arith.addf %43, %205 : vector<16x48xf32>
    %c0_74 = arith.constant 0 : index
    %c0_75 = arith.constant 0 : index
    %207 = vector.load %arg11[%c0_74, %c0_75] : memref<1x48xf32, #tpu.memory_space<vmem>>, vector<1x48xf32>
    %c0_76 = arith.constant 0 : index
    %c0_77 = arith.constant 0 : index
    %208 = vector.load %arg12[%c0_76, %c0_77] : memref<1x48xf32, #tpu.memory_space<vmem>>, vector<1x48xf32>
    %cst_78 = arith.constant dense<0.000000e+00> : vector<16xf32>
    %209 = vector.multi_reduction <add>, %206, %cst_78 [1] : vector<16x48xf32> to vector<16xf32>
    %210 = vector.shape_cast %209 : vector<16xf32> to vector<16x1xf32>
    %cst_79 = arith.constant 4.800000e+01 : f32
    %211 = vector.broadcast %cst_79 : f32 to vector<16x1xf32>
    %212 = arith.divf %210, %211 : vector<16x1xf32>
    %213 = vector.broadcast %212 : vector<16x1xf32> to vector<16x48xf32>
    %214 = arith.subf %206, %213 : vector<16x48xf32>
    %215 = arith.mulf %214, %214 : vector<16x48xf32>
    %cst_80 = arith.constant dense<0.000000e+00> : vector<16xf32>
    %216 = vector.multi_reduction <add>, %215, %cst_80 [1] : vector<16x48xf32> to vector<16xf32>
    %217 = vector.shape_cast %216 : vector<16xf32> to vector<16x1xf32>
    %cst_81 = arith.constant 4.800000e+01 : f32
    %218 = vector.broadcast %cst_81 : f32 to vector<16x1xf32>
    %219 = arith.divf %217, %218 : vector<16x1xf32>
    %220 = vector.broadcast %212 : vector<16x1xf32> to vector<16x48xf32>
    %221 = arith.subf %206, %220 : vector<16x48xf32>
    %cst_82 = arith.constant 9.99999996E-13 : f32
    %222 = vector.broadcast %cst_82 : f32 to vector<16x1xf32>
    %223 = arith.addf %219, %222 : vector<16x1xf32>
    %224 = math.rsqrt %223 : vector<16x1xf32>
    %225 = vector.broadcast %224 : vector<16x1xf32> to vector<16x48xf32>
    %226 = arith.mulf %221, %225 : vector<16x48xf32>
    %227 = vector.broadcast %207 : vector<1x48xf32> to vector<16x48xf32>
    %228 = arith.mulf %226, %227 : vector<16x48xf32>
    %229 = vector.broadcast %208 : vector<1x48xf32> to vector<16x48xf32>
    %230 = arith.addf %228, %229 : vector<16x48xf32>
    %231 = arith.truncf %230 : vector<16x48xf32> to vector<16x48xbf16>
    %c0_83 = arith.constant 0 : index
    %c0_84 = arith.constant 0 : index
    %232 = vector.load %arg13[%c0_83, %c0_84] : memref<48x192xbf16, #tpu.memory_space<vmem>>, vector<48x192xbf16>
    %cst_85 = arith.constant dense<0.000000e+00> : vector<16x192xf32>
    %233 = tpu.matmul %231, %232, %cst_85 {dimension_numbers = #tpu.dot_dimension_numbers<[1], [0], [0], [1], [0, 0, 1, 1], [], []>} : vector<16x48xbf16>, vector<48x192xbf16>, vector<16x192xf32> -> vector<16x192xf32>
    %c0_86 = arith.constant 0 : index
    %c0_87 = arith.constant 0 : index
    %234 = vector.load %arg14[%c0_86, %c0_87] : memref<1x192xf32, #tpu.memory_space<vmem>>, vector<1x192xf32>
    %235 = vector.broadcast %234 : vector<1x192xf32> to vector<16x192xf32>
    %236 = arith.addf %233, %235 : vector<16x192xf32>
    %237 = arith.mulf %236, %236 : vector<16x192xf32>
    %238 = arith.mulf %236, %237 : vector<16x192xf32>
    %cst_88 = arith.constant 4.471500e-02 : f32
    %239 = vector.broadcast %cst_88 : f32 to vector<16x192xf32>
    %240 = arith.mulf %239, %238 : vector<16x192xf32>
    %241 = arith.addf %236, %240 : vector<16x192xf32>
    %cst_89 = arith.constant 0.797884583 : f32
    %242 = vector.broadcast %cst_89 : f32 to vector<16x192xf32>
    %243 = arith.mulf %242, %241 : vector<16x192xf32>
    %244 = math.tanh %243 : vector<16x192xf32>
    %cst_90 = arith.constant 1.000000e+00 : f32
    %245 = vector.broadcast %cst_90 : f32 to vector<16x192xf32>
    %246 = arith.addf %245, %244 : vector<16x192xf32>
    %cst_91 = arith.constant 5.000000e-01 : f32
    %247 = vector.broadcast %cst_91 : f32 to vector<16x192xf32>
    %248 = arith.mulf %247, %246 : vector<16x192xf32>
    %249 = arith.mulf %236, %248 : vector<16x192xf32>
    %250 = arith.truncf %249 : vector<16x192xf32> to vector<16x192xbf16>
    %c0_92 = arith.constant 0 : index
    %c0_93 = arith.constant 0 : index
    %251 = vector.load %arg15[%c0_92, %c0_93] : memref<192x48xbf16, #tpu.memory_space<vmem>>, vector<192x48xbf16>
    %cst_94 = arith.constant dense<0.000000e+00> : vector<16x48xf32>
    %252 = tpu.matmul %250, %251, %cst_94 {dimension_numbers = #tpu.dot_dimension_numbers<[1], [0], [0], [1], [0, 0, 1, 1], [], []>} : vector<16x192xbf16>, vector<192x48xbf16>, vector<16x48xf32> -> vector<16x48xf32>
    %c0_95 = arith.constant 0 : index
    %c0_96 = arith.constant 0 : index
    %253 = vector.load %arg16[%c0_95, %c0_96] : memref<1x48xf32, #tpu.memory_space<vmem>>, vector<1x48xf32>
    %254 = vector.broadcast %253 : vector<1x48xf32> to vector<16x48xf32>
    %255 = arith.addf %252, %254 : vector<16x48xf32>
    %256 = arith.addf %230, %255 : vector<16x48xf32>
    %c0_97 = arith.constant 0 : index
    %c0_98 = arith.constant 0 : index
    %257 = vector.load %arg17[%c0_97, %c0_98] : memref<1x48xf32, #tpu.memory_space<vmem>>, vector<1x48xf32>
    %c0_99 = arith.constant 0 : index
    %c0_100 = arith.constant 0 : index
    %258 = vector.load %arg18[%c0_99, %c0_100] : memref<1x48xf32, #tpu.memory_space<vmem>>, vector<1x48xf32>
    %cst_101 = arith.constant dense<0.000000e+00> : vector<16xf32>
    %259 = vector.multi_reduction <add>, %256, %cst_101 [1] : vector<16x48xf32> to vector<16xf32>
    %260 = vector.shape_cast %259 : vector<16xf32> to vector<16x1xf32>
    %cst_102 = arith.constant 4.800000e+01 : f32
    %261 = vector.broadcast %cst_102 : f32 to vector<16x1xf32>
    %262 = arith.divf %260, %261 : vector<16x1xf32>
    %263 = vector.broadcast %262 : vector<16x1xf32> to vector<16x48xf32>
    %264 = arith.subf %256, %263 : vector<16x48xf32>
    %265 = arith.mulf %264, %264 : vector<16x48xf32>
    %cst_103 = arith.constant dense<0.000000e+00> : vector<16xf32>
    %266 = vector.multi_reduction <add>, %265, %cst_103 [1] : vector<16x48xf32> to vector<16xf32>
    %267 = vector.shape_cast %266 : vector<16xf32> to vector<16x1xf32>
    %cst_104 = arith.constant 4.800000e+01 : f32
    %268 = vector.broadcast %cst_104 : f32 to vector<16x1xf32>
    %269 = arith.divf %267, %268 : vector<16x1xf32>
    %270 = vector.broadcast %262 : vector<16x1xf32> to vector<16x48xf32>
    %271 = arith.subf %256, %270 : vector<16x48xf32>
    %cst_105 = arith.constant 9.99999996E-13 : f32
    %272 = vector.broadcast %cst_105 : f32 to vector<16x1xf32>
    %273 = arith.addf %269, %272 : vector<16x1xf32>
    %274 = math.rsqrt %273 : vector<16x1xf32>
    %275 = vector.broadcast %274 : vector<16x1xf32> to vector<16x48xf32>
    %276 = arith.mulf %271, %275 : vector<16x48xf32>
    %277 = vector.broadcast %257 : vector<1x48xf32> to vector<16x48xf32>
    %278 = arith.mulf %276, %277 : vector<16x48xf32>
    %279 = vector.broadcast %258 : vector<1x48xf32> to vector<16x48xf32>
    %280 = arith.addf %278, %279 : vector<16x48xf32>
    %281 = tpu.iota {dimensions = array<i32: 1>} : vector<2x16xi32>
    %282 = tpu.iota {dimensions = array<i32: 0>} : vector<2x16xi32>
    %c8_i32 = arith.constant 8 : i32
    %283 = vector.broadcast %c8_i32 : i32 to vector<2x16xi32>
    %284 = arith.muli %283, %282 : vector<2x16xi32>
    %285 = arith.cmpi eq, %281, %284 : vector<2x16xi32>
    %286 = arith.extui %285 : vector<2x16xi1> to vector<2x16xi32>
    %287 = arith.sitofp %286 : vector<2x16xi32> to vector<2x16xf32>
    %cst_106 = arith.constant dense<0.000000e+00> : vector<2x48xf32>
    %288 = tpu.matmul %287, %280, %cst_106 {dimension_numbers = #tpu.dot_dimension_numbers<[1], [0], [0], [1], [0, 0, 1, 1], [], []>} : vector<2x16xf32>, vector<16x48xf32>, vector<2x48xf32> -> vector<2x48xf32>
    %289 = arith.truncf %288 : vector<2x48xf32> to vector<2x48xbf16>
    %c0_107 = arith.constant 0 : index
    %c0_108 = arith.constant 0 : index
    %290 = vector.load %arg19[%c0_107, %c0_108] : memref<48x48xbf16, #tpu.memory_space<vmem>>, vector<48x48xbf16>
    %cst_109 = arith.constant dense<0.000000e+00> : vector<2x48xf32>
    %291 = tpu.matmul %289, %290, %cst_109 {dimension_numbers = #tpu.dot_dimension_numbers<[1], [0], [0], [1], [0, 0, 1, 1], [], []>} : vector<2x48xbf16>, vector<48x48xbf16>, vector<2x48xf32> -> vector<2x48xf32>
    %c0_110 = arith.constant 0 : index
    %c0_111 = arith.constant 0 : index
    %292 = vector.load %arg20[%c0_110, %c0_111] : memref<1x48xf32, #tpu.memory_space<vmem>>, vector<1x48xf32>
    %293 = vector.broadcast %292 : vector<1x48xf32> to vector<2x48xf32>
    %294 = arith.addf %291, %293 : vector<2x48xf32>
    %295 = math.tanh %294 : vector<2x48xf32>
    %296 = arith.truncf %295 : vector<2x48xf32> to vector<2x48xbf16>
    %c0_112 = arith.constant 0 : index
    %c0_113 = arith.constant 0 : index
    %297 = vector.load %arg21[%c0_112, %c0_113] : memref<48x128xbf16, #tpu.memory_space<vmem>>, vector<48x128xbf16>
    %cst_114 = arith.constant dense<0.000000e+00> : vector<2x128xf32>
    %298 = tpu.matmul %296, %297, %cst_114 {dimension_numbers = #tpu.dot_dimension_numbers<[1], [0], [0], [1], [0, 0, 1, 1], [], []>} : vector<2x48xbf16>, vector<48x128xbf16>, vector<2x128xf32> -> vector<2x128xf32>
    %c0_115 = arith.constant 0 : index
    %c0_116 = arith.constant 0 : index
    %299 = vector.load %arg22[%c0_115, %c0_116] : memref<1x128xf32, #tpu.memory_space<vmem>>, vector<1x128xf32>
    %300 = vector.broadcast %299 : vector<1x128xf32> to vector<2x128xf32>
    %301 = arith.addf %298, %300 : vector<2x128xf32>
    %c0_117 = arith.constant 0 : index
    %c0_118 = arith.constant 0 : index
    %302 = vector.load %arg23[%c0_117, %c0_118] : memref<2x128xf32, #tpu.memory_space<vmem>>, vector<2x128xf32>
    tpu.vector_store %arg23[%c0_117, %c0_118], %301 {strides = array<i32>} : memref<2x128xf32, #tpu.memory_space<vmem>>, vector<2x128xf32>,
    return
  }
}

</mosaic_0001>

<llo_original>
// kernel: bert_spc_forward.1
$region0: #{bert_spc_forward.1}
  #allocation0 [shape = 'u32[]', space=smem, size = 0x4, offset = 0x4, fixed_abs, tag = 'smem constant byte address 0x4 - core index']
  #allocation1 [shape = 'u32[144,128]{1,0:T(1,128)}', space=vmem, size = 0x12000, scoped, tag = 'internal scratch']
  %s0 = inlined_call_operand.vmem [shape: s32[16,1], index: 0, kind: input, shape index: {}]
  %s1 = inlined_call_operand.vmem [shape: s32[16,1], index: 1, kind: input, shape index: {}]
  %s2 = inlined_call_operand.vmem [shape: f32[30,48], index: 2, kind: input, shape index: {}]
  %s3 = inlined_call_operand.vmem [shape: f32[2,48], index: 3, kind: input, shape index: {}]
  %s4 = inlined_call_operand.vmem [shape: f32[16,48], index: 4, kind: input, shape index: {}]
  %s5 = inlined_call_operand.vmem [shape: f32[1,48], index: 5, kind: input, shape index: {}]
  %s6 = inlined_call_operand.vmem [shape: f32[1,48], index: 6, kind: input, shape index: {}]
  %s7 = inlined_call_operand.vmem [shape: bf16[48,144], index: 7, kind: input, shape index: {}]
  %s8 = inlined_call_operand.vmem [shape: f32[1,144], index: 8, kind: input, shape index: {}]
  %s9 = inlined_call_operand.vmem [shape: bf16[48,48], index: 9, kind: input, shape index: {}]
  %s10 = inlined_call_operand.vmem [shape: f32[1,48], index: 10, kind: input, shape index: {}]
  %s11 = inlined_call_operand.vmem [shape: f32[1,48], index: 11, kind: input, shape index: {}]
  %s12 = inlined_call_operand.vmem [shape: f32[1,48], index: 12, kind: input, shape index: {}]
  %s13 = inlined_call_operand.vmem [shape: bf16[48,192], index: 13, kind: input, shape index: {}]
  %s14 = inlined_call_operand.vmem [shape: f32[1,192], index: 14, kind: input, shape index: {}]
  %s15 = inlined_call_operand.vmem [shape: bf16[192,48], index: 15, kind: input, shape index: {}]
  %s16 = inlined_call_operand.vmem [shape: f32[1,48], index: 16, kind: input, shape index: {}]
  %s17 = inlined_call_operand.vmem [shape: f32[1,48], index: 17, kind: input, shape index: {}]
  %s18 = inlined_call_operand.vmem [shape: f32[1,48], index: 18, kind: input, shape index: {}]
  %s19 = inlined_call_operand.vmem [shape: bf16[48,48], index: 19, kind: input, shape index: {}]
  %s20 = inlined_call_operand.vmem [shape: f32[1,48], index: 20, kind: input, shape index: {}]
  %s21 = inlined_call_operand.vmem [shape: bf16[48,128], index: 21, kind: input, shape index: {}]
  %s22 = inlined_call_operand.vmem [shape: f32[1,128], index: 22, kind: input, shape index: {}]
  %s23 = inlined_call_operand.hbm [shape: f32[2,128], index: 23, kind: output, shape index: {}]
  %s24 = sld [smem:[#allocation0]]
  $region102: #{bert_spc_forward.1} parent=0
    _
  %s26 = ssub.s32 1, %s24
  %s27 = scalar_select 0, %s26, %s24
  $region1: #{bert_spc_forward.1} parent=0
    #allocation2 [shape = 'u8[1024]{0}', space=vmem, size = 0x400, scoped, tag = 'output window, operand 0, single buffered']
    #allocation3 [shape = 's32[1]{0}', space=sflag, size = 0x4, scoped, tag = 'scoped memory for bert_spc_forward.1']
    %28 = vsyncpa [#allocation3], 0
    // Predicated region
    $region2: #{bert_spc_forward.1} parent=1 // pred_check
      _
    $region3: #{bert_spc_forward.1} parent=1 // pred_check_branch
      %30 = sbr.rel (0) target = $region5
    $region4: #{bert_spc_forward.1} parent=1 // pred_region
      _
    $region5: #{bert_spc_forward.1} parent=1 // pred_fallthru
      _
    // Predicated region
    $region6: #{bert_spc_forward.1} parent=1 // pred_check
      _
    $region7: #{bert_spc_forward.1} parent=1 // pred_check_branch
      %32 = sbr.rel (0) target = $region9
    $region8: #{bert_spc_forward.1} parent=1 // pred_region
      _
    $region9: #{bert_spc_forward.1} parent=1 // pred_fallthru
      _
    // Predicated region
    $region10: #{bert_spc_forward.1} parent=1 // pred_check
      _
    $region11: #{bert_spc_forward.1} parent=1 // pred_check_branch
      %34 = sbr.rel (0) target = $region13
    $region12: #{bert_spc_forward.1} parent=1 // pred_region
      _
    $region13: #{bert_spc_forward.1} parent=1 // pred_fallthru
      _
    // Predicated region
    $region14: #{bert_spc_forward.1} parent=1 // pred_check
      _
    $region15: #{bert_spc_forward.1} parent=1 // pred_check_branch
      %36 = sbr.rel (0) target = $region17
    $region16: #{bert_spc_forward.1} parent=1 // pred_region
      _
    $region17: #{bert_spc_forward.1} parent=1 // pred_fallthru
      _
    // Predicated region
    $region18: #{bert_spc_forward.1} parent=1 // pred_check
      _
    $region19: #{bert_spc_forward.1} parent=1 // pred_check_branch
      %38 = sbr.rel (0) target = $region21
    $region20: #{bert_spc_forward.1} parent=1 // pred_region
      _
    $region21: #{bert_spc_forward.1} parent=1 // pred_fallthru
      _
    // Predicated region
    $region22: #{bert_spc_forward.1} parent=1 // pred_check
      _
    $region23: #{bert_spc_forward.1} parent=1 // pred_check_branch
      %40 = sbr.rel (0) target = $region25
    $region24: #{bert_spc_forward.1} parent=1 // pred_region
      _
    $region25: #{bert_spc_forward.1} parent=1 // pred_fallthru
      _
    // Predicated region
    $region26: #{bert_spc_forward.1} parent=1 // pred_check
      _
    $region27: #{bert_spc_forward.1} parent=1 // pred_check_branch
      %42 = sbr.rel (0) target = $region29
    $region28: #{bert_spc_forward.1} parent=1 // pred_region
      _
    $region29: #{bert_spc_forward.1} parent=1 // pred_fallthru
      _
    // Predicated region
    $region30: #{bert_spc_forward.1} parent=1 // pred_check
      _
    $region31: #{bert_spc_forward.1} parent=1 // pred_check_branch
      %44 = sbr.rel (0) target = $region33
    $region32: #{bert_spc_forward.1} parent=1 // pred_region
      _
    $region33: #{bert_spc_forward.1} parent=1 // pred_fallthru
      _
    // Predicated region
    $region34: #{bert_spc_forward.1} parent=1 // pred_check
      _
    $region35: #{bert_spc_forward.1} parent=1 // pred_check_branch
      %46 = sbr.rel (0) target = $region37
    $region36: #{bert_spc_forward.1} parent=1 // pred_region
      _
    $region37: #{bert_spc_forward.1} parent=1 // pred_fallthru
      _
    // Predicated region
    $region38: #{bert_spc_forward.1} parent=1 // pred_check
      _
    $region39: #{bert_spc_forward.1} parent=1 // pred_check_branch
      %48 = sbr.rel (0) target = $region41
    $region40: #{bert_spc_forward.1} parent=1 // pred_region
      _
    $region41: #{bert_spc_forward.1} parent=1 // pred_fallthru
      _
    // Predicated region
    $region42: #{bert_spc_forward.1} parent=1 // pred_check
      _
    $region43: #{bert_spc_forward.1} parent=1 // pred_check_branch
      %50 = sbr.rel (0) target = $region45
    $region44: #{bert_spc_forward.1} parent=1 // pred_region
      _
    $region45: #{bert_spc_forward.1} parent=1 // pred_fallthru
      _
    // Predicated region
    $region46: #{bert_spc_forward.1} parent=1 // pred_check
      _
    $region47: #{bert_spc_forward.1} parent=1 // pred_check_branch
      %52 = sbr.rel (0) target = $region49
    $region48: #{bert_spc_forward.1} parent=1 // pred_region
      _
    $region49: #{bert_spc_forward.1} parent=1 // pred_fallthru
      _
    // Predicated region
    $region50: #{bert_spc_forward.1} parent=1 // pred_check
      _
    $region51: #{bert_spc_forward.1} parent=1 // pred_check_branch
      %54 = sbr.rel (0) target = $region53
    $region52: #{bert_spc_forward.1} parent=1 // pred_region
      _
    $region53: #{bert_spc_forward.1} parent=1 // pred_fallthru
      _
    // Predicated region
    $region54: #{bert_spc_forward.1} parent=1 // pred_check
      _
    $region55: #{bert_spc_forward.1} parent=1 // pred_check_branch
      %56 = sbr.rel (0) target = $region57
    $region56: #{bert_spc_forward.1} parent=1 // pred_region
      _
    $region57: #{bert_spc_forward.1} parent=1 // pred_fallthru
      _
    // Predicated region
    $region58: #{bert_spc_forward.1} parent=1 // pred_check
      _
    $region59: #{bert_spc_forward.1} parent=1 // pred_check_branch
      %58 = sbr.rel (0) target = $region61
    $region60: #{bert_spc_forward.1} parent=1 // pred_region
      _
    $region61: #{bert_spc_forward.1} parent=1 // pred_fallthru
      _
    // Predicated region
    $region62: #{bert_spc_forward.1} parent=1 // pred_check
      _
    $region63: #{bert_spc_forward.1} parent=1 // pred_check_branch
      %60 = sbr.rel (0) target = $region65
    $region64: #{bert_spc_forward.1} parent=1 // pred_region
      _
    $region65: #{bert_spc_forward.1} parent=1 // pred_fallthru
      _
    // Predicated region
    $region66: #{bert_spc_forward.1} parent=1 // pred_check
      _
    $region67: #{bert_spc_forward.1} parent=1 // pred_check_branch
      %62 = sbr.rel (0) target = $region69
    $region68: #{bert_spc_forward.1} parent=1 // pred_region
      _
    $region69: #{bert_spc_forward.1} parent=1 // pred_fallthru
      _
    // Predicated region
    $region70: #{bert_spc_forward.1} parent=1 // pred_check
      _
    $region71: #{bert_spc_forward.1} parent=1 // pred_check_branch
      %64 = sbr.rel (0) target = $region73
    $region72: #{bert_spc_forward.1} parent=1 // pred_region
      _
    $region73: #{bert_spc_forward.1} parent=1 // pred_fallthru
      _
    // Predicated region
    $region74: #{bert_spc_forward.1} parent=1 // pred_check
      _
    $region75: #{bert_spc_forward.1} parent=1 // pred_check_branch
      %66 = sbr.rel (0) target = $region77
    $region76: #{bert_spc_forward.1} parent=1 // pred_region
      _
    $region77: #{bert_spc_forward.1} parent=1 // pred_fallthru
      _
    // Predicated region
    $region78: #{bert_spc_forward.1} parent=1 // pred_check
      _
    $region79: #{bert_spc_forward.1} parent=1 // pred_check_branch
      %68 = sbr.rel (0) target = $region81
    $region80: #{bert_spc_forward.1} parent=1 // pred_region
      _
    $region81: #{bert_spc_forward.1} parent=1 // pred_fallthru
      _
    // Predicated region
    $region82: #{bert_spc_forward.1} parent=1 // pred_check
      _
    $region83: #{bert_spc_forward.1} parent=1 // pred_check_branch
      %70 = sbr.rel (0) target = $region85
    $region84: #{bert_spc_forward.1} parent=1 // pred_region
      _
    $region85: #{bert_spc_forward.1} parent=1 // pred_fallthru
      _
    // Predicated region
    $region86: #{bert_spc_forward.1} parent=1 // pred_check
      _
    $region87: #{bert_spc_forward.1} parent=1 // pred_check_branch
      %72 = sbr.rel (0) target = $region89
    $region88: #{bert_spc_forward.1} parent=1 // pred_region
      _
    $region89: #{bert_spc_forward.1} parent=1 // pred_fallthru
      _
    // Predicated region
    $region90: #{bert_spc_forward.1} parent=1 // pred_check
      _
    $region91: #{bert_spc_forward.1} parent=1 // pred_check_branch
      %74 = sbr.rel (0) target = $region93
    $region92: #{bert_spc_forward.1} parent=1 // pred_region
      _
    $region93: #{bert_spc_forward.1} parent=1 // pred_fallthru
      _
    %v76 = vld [vmem:[%s0] sm:$0xff]
    %v77 = vld [vmem:[%s0 + $0x8] sm:$0xff]
    %v78 = vld [vmem:[%s1] sm:$0xff]
    %v79 = vld [vmem:[%s1 + $0x8] sm:$0xff]
    %v80 = vlaneseq
    %v81 = vand.u32 %v80, 127
    %82 = vset.pattern.permute.xlu0 0
    %83 = vperm.xlu0 %82, %v76
    %v84 = vpop.permute.xlu0 %83
    %85 = vset.pattern.permute.xlu0 0
    %86 = vperm.xlu0 %85, %v77
    %v87 = vpop.permute.xlu0 %86
    %vm88 = vcmp.eq.s32.totalorder %v84, %v81
    %vm89 = vcmp.eq.s32.totalorder %v87, %v81
    %v90 = vsel %vm88, 1, 0
    %v91 = vsel %vm89, 1, 0
    %v92 = vcvt.s32.f32 %v90
    %v93 = vcvt.s32.f32 %v91
    %94 = vset.pattern.permute.xlu0 0
    %95 = vperm.xlu0 %94, %v78
    %v96 = vpop.permute.xlu0 %95
    %97 = vset.pattern.permute.xlu0 0
    %98 = vperm.xlu0 %97, %v79
    %v99 = vpop.permute.xlu0 %98
    %vm100 = vcmp.eq.s32.totalorder %v96, %v81
    %vm101 = vcmp.eq.s32.totalorder %v99, %v81
    %v102 = vsel %vm100, 1, 0
    %v103 = vsel %vm101, 1, 0
    %v104 = vcvt.s32.f32 %v102
    %v105 = vcvt.s32.f32 %v103
    %v106 = vld [vmem:[%s2] sm:$0xff]
    %v107 = vld [vmem:[%s2 + $0x8] sm:$0xff]
    %v108 = vld [vmem:[%s2 + $0x10] sm:$0xff]
    %v109 = vld [vmem:[%s2 + $0x18] sm:$0x3f]
    %v110 = vld [vmem:[%s3] sm:$0x3]
    %vm111 = vcmask 15360
    %v113 = vsel %vm111, %v104, 0
    %v116 = vsel %vm111, %v105, 0
    %vm118 = vcmask 1041408
    %v120 = vsel %vm118, %v110, 0
    %122 = vmatprep.subr.mxu0 0.0
    %123 = vmatpush1.msra.mxu0 %v120
    %124 = vmatprep.subr.mxu0 0.0
    %125 = vmatpush1.msra.mxu0 0.0
    %126 = vmatprep.subr.mxu0 0.0
    %127 = vmatpush1.msra.mxu0 0.0
    %128 = vmatprep.subr.mxu0 0.0
    %129 = vmatpush1.msra.mxu0 0.0
    %130 = vmatprep.subr.mxu0 0.0
    %131 = vmatpush1.msra.mxu0 0.0
    %132 = vmatprep.subr.mxu0 0.0
    %133 = vmatpush1.msra.mxu0 0.0
    %134 = vmatprep.subr.mxu0 0.0
    %135 = vmatpush1.msra.mxu0 0.0
    %136 = vmatprep.subr.mxu0 0.0
    %137 = vmatpush1.msra.mxu0 0.0
    %138 = vmatprep.subr.mxu0 0.0
    %139 = vmatpush1.msra.mxu0 0.0
    %140 = vmatprep.subr.mxu0 0.0
    %141 = vmatpush1.msra.mxu0 0.0
    %142 = vmatprep.subr.mxu0 0.0
    %143 = vmatpush1.msra.mxu0 0.0
    %144 = vmatprep.subr.mxu0 0.0
    %145 = vmatpush1.msra.mxu0 0.0
    %146 = vmatprep.subr.mxu0 0.0
    %147 = vmatpush1.msra.mxu0 0.0
    %148 = vmatprep.subr.mxu0 0.0
    %149 = vmatpush1.msra.mxu0 0.0
    %150 = vmatprep.subr.mxu0 0.0
    %151 = vmatpush1.msra.mxu0 0.0
    %152 = vmatprep.subr.mxu0 0.0
    %153 = vmatpush1.msra.mxu0 0.0
    %154 = vmatprep.subr.mxu0 0.0
    %155 = vmatpush1.msra.mxu0 0.0
    %156 = vmatprep.subr.mxu0 0.0
    %157 = vmatpush1.msra.mxu0 0.0
    %158 = vmatprep.subr.mxu0 0.0
    %159 = vmatpush1.msra.mxu0 0.0
    %160 = vmatprep.subr.mxu0 0.0
    %161 = vmatpush1.msra.mxu0 0.0
    %162 = vmatprep.subr.mxu0 0.0
    %163 = vmatpush1.msra.mxu0 0.0
    %164 = vmatprep.subr.mxu0 0.0
    %165 = vmatpush1.msra.mxu0 0.0
    %166 = vmatprep.subr.mxu0 0.0
    %167 = vmatpush1.msra.mxu0 0.0
    %168 = vmatprep.subr.mxu0 0.0
    %169 = vmatpush1.msra.mxu0 0.0
    %170 = vmatprep.subr.mxu0 0.0
    %171 = vmatpush1.msra.mxu0 0.0
    %172 = vmatprep.subr.mxu0 0.0
    %173 = vmatpush1.msra.mxu0 0.0
    %174 = vmatprep.subr.mxu0 0.0
    %175 = vmatpush1.msra.mxu0 0.0
    %176 = vmatprep.subr.mxu0 0.0
    %177 = vmatpush1.msra.mxu0 0.0
    %178 = vmatprep.subr.mxu0 0.0
    %179 = vmatpush1.msra.mxu0 0.0
    %180 = vmatprep.subr.mxu0 0.0
    %181 = vmatpush1.msra.mxu0 0.0
    %182 = vmatprep.subr.mxu0 0.0
    %183 = vmatpush1.msra.mxu0 0.0
    %184 = vmatprep.subr.mxu0 0.0
    %185 = vmatpush1.msra.mxu0 0.0
    %186 = vmatprep.mubr.f32.mxu0 0.0
    %187 = vmatmul.mubr.f32.gmra.mrb[0].mxu0 %v113
    %v188 = vpop.f32.mrb[0].mxu0
    %v189 = vadd.f32 0.0, %v188
    %v190 = vpop.f32.mrb[0].mxu0
    %191 = vmatprep.mubr.f32.mxu0 0.0
    %192 = vmatmul.mubr.f32.gmra.mrb[0].mxu0 %v116
    %v193 = vpop.f32.mrb[0].mxu0
    %v194 = vadd.f32 0.0, %v193
    %v195 = vpop.f32.mrb[0].mxu0
    %196 = vdwg.mxu0
    %vm197 = vcmask 244736
    %v199 = vsel %vm197, %v92, 0
    %v202 = vsel %vm197, %v93, 0
    %vm204 = vcmask 1045504
    %v206 = vsel %vm204, %v109, 0
    %208 = vmatprep.subr.mxu0 0.0
    %209 = vmatpush1.msra.mxu0 %v106
    %210 = vmatprep.subr.mxu0 0.0
    %211 = vmatpush1.msra.mxu0 %v107
    %212 = vmatprep.subr.mxu0 0.0
    %213 = vmatpush1.msra.mxu0 %v108
    %214 = vmatprep.subr.mxu0 0.0
    %215 = vmatpush1.msra.mxu0 %v206
    %216 = vmatprep.subr.mxu0 0.0
    %217 = vmatpush1.msra.mxu0 0.0
    %218 = vmatprep.subr.mxu0 0.0
    %219 = vmatpush1.msra.mxu0 0.0
    %220 = vmatprep.subr.mxu0 0.0
    %221 = vmatpush1.msra.mxu0 0.0
    %222 = vmatprep.subr.mxu0 0.0
    %223 = vmatpush1.msra.mxu0 0.0
    %224 = vmatprep.subr.mxu0 0.0
    %225 = vmatpush1.msra.mxu0 0.0
    %226 = vmatprep.subr.mxu0 0.0
    %227 = vmatpush1.msra.mxu0 0.0
    %228 = vmatprep.subr.mxu0 0.0
    %229 = vmatpush1.msra.mxu0 0.0
    %230 = vmatprep.subr.mxu0 0.0
    %231 = vmatpush1.msra.mxu0 0.0
    %232 = vmatprep.subr.mxu0 0.0
    %233 = vmatpush1.msra.mxu0 0.0
    %234 = vmatprep.subr.mxu0 0.0
    %235 = vmatpush1.msra.mxu0 0.0
    %236 = vmatprep.subr.mxu0 0.0
    %237 = vmatpush1.msra.mxu0 0.0
    %238 = vmatprep.subr.mxu0 0.0
    %239 = vmatpush1.msra.mxu0 0.0
    %240 = vmatprep.subr.mxu0 0.0
    %241 = vmatpush1.msra.mxu0 0.0
    %242 = vmatprep.subr.mxu0 0.0
    %243 = vmatpush1.msra.mxu0 0.0
    %244 = vmatprep.subr.mxu0 0.0
    %245 = vmatpush1.msra.mxu0 0.0
    %246 = vmatprep.subr.mxu0 0.0
    %247 = vmatpush1.msra.mxu0 0.0
    %248 = vmatprep.subr.mxu0 0.0
    %249 = vmatpush1.msra.mxu0 0.0
    %250 = vmatprep.subr.mxu0 0.0
    %251 = vmatpush1.msra.mxu0 0.0
    %252 = vmatprep.subr.mxu0 0.0
    %253 = vmatpush1.msra.mxu0 0.0
    %254 = vmatprep.subr.mxu0 0.0
    %255 = vmatpush1.msra.mxu0 0.0
    %256 = vmatprep.subr.mxu0 0.0
    %257 = vmatpush1.msra.mxu0 0.0
    %258 = vmatprep.subr.mxu0 0.0
    %259 = vmatpush1.msra.mxu0 0.0
    %260 = vmatprep.subr.mxu0 0.0
    %261 = vmatpush1.msra.mxu0 0.0
    %262 = vmatprep.subr.mxu0 0.0
    %263 = vmatpush1.msra.mxu0 0.0
    %264 = vmatprep.subr.mxu0 0.0
    %265 = vmatpush1.msra.mxu0 0.0
    %266 = vmatprep.subr.mxu0 0.0
    %267 = vmatpush1.msra.mxu0 0.0
    %268 = vmatprep.subr.mxu0 0.0
    %269 = vmatpush1.msra.mxu0 0.0
    %270 = vmatprep.subr.mxu0 0.0
    %271 = vmatpush1.msra.mxu0 0.0
    %272 = vmatprep.mubr.f32.mxu0 0.0
    %273 = vmatmul.mubr.f32.gmra.mrb[0].mxu0 %v199
    %v274 = vpop.f32.mrb[0].mxu0
    %v275 = vadd.f32 %v189, %v274
    %v276 = vpop.f32.mrb[0].mxu0
    %277 = vmatprep.mubr.f32.mxu0 0.0
    %278 = vmatmul.mubr.f32.gmra.mrb[0].mxu0 %v202
    %v279 = vpop.f32.mrb[0].mxu0
    %v280 = vadd.f32 %v194, %v279
    %v281 = vpop.f32.mrb[0].mxu0
    %282 = vdwg.mxu0
    %v283 = vld [vmem:[%s4] sm:$0xff]
    %v284 = vadd.f32 %v275, %v283
    %v285 = vadd.f32 %v280, %v283
    %v286 = vld [vmem:[%s5] sm:$0x1]
    %v287 = vld [vmem:[%s6] sm:$0x1]
    %vm288 = vcmask 392192
    %v289 = vsel %vm288, %v284, 0.0
    %290 = vadd.xlane.f32.xlu0 %v289
    %v291 = vpop.xlane.xlu0 %290
    %v292 = vsel %vm288, %v285, 0.0
    %293 = vadd.xlane.f32.xlu0 %v292
    %v294 = vpop.xlane.xlu0 %293
    %v295 = vrcp.pop 48.0
    %v296 = vmul.f32 %v291, %v295
    %v297 = vmul.f32 %v294, %v295
    %v298 = vsub.f32 %v284, %v296
    %v299 = vsub.f32 %v285, %v297
    %v300 = vmul.f32 %v298, %v298
    %v301 = vmul.f32 %v299, %v299
    %v302 = vsel %vm288, %v300, 0.0
    %303 = vadd.xlane.f32.xlu0 %v302
    %v304 = vpop.xlane.xlu0 %303
    %v305 = vsel %vm288, %v301, 0.0
    %306 = vadd.xlane.f32.xlu0 %v305
    %v307 = vpop.xlane.xlu0 %306
    %v308 = vmul.f32 %v304, %v295
    %v309 = vmul.f32 %v307, %v295
    %v310 = vadd.f32 %v308, 1e-12
    %v311 = vadd.f32 %v309, 1e-12
    %v312 = vrsqrt.pop %v310
    %v313 = vrsqrt.pop %v311
    %v314 = vmul.f32 %v298, %v312
    %v315 = vmul.f32 %v299, %v313
    %v317 = vlaneseq
    %v318 = vshrl.u32 %v317, 7
    %v319 = vsub.s32 0, %v318
    %v320 = vrot.slane %v286, %v319
    %v322 = vmul.f32 %v314, %v320
    %v323 = vmul.f32 %v315, %v320
    %v325 = vlaneseq
    %v326 = vshrl.u32 %v325, 7
    %v327 = vsub.s32 0, %v326
    %v328 = vrot.slane %v287, %v327
    %v330 = vadd.f32 %v322, %v328
    %v331 = vadd.f32 %v323, %v328
    %v332 = vpack.c.bf16 %v331, %v330
    %v333 = vld [vmem:[%s7] sm:$0xff]
    %v334 = vld [vmem:[%s7 + $0x8] sm:$0xff]
    %v335 = vld [vmem:[%s7 + $0x10] sm:$0xff]
    %v336 = vld [vmem:[%s7 + $0x18] sm:$0xff]
    %v337 = vld [vmem:[%s7 + $0x20] sm:$0xff]
    %v338 = vld [vmem:[%s7 + $0x28] sm:$0xff]
    %v339 = vld [vmem:[%s8] sm:$0x3]
    %v341 = vlaneseq
    %v342 = vshrl.u32 %v341, 7
    %v343 = vsub.s32 0, %v342
    %v344 = vrot.slane %v339, %v343
    %v345 = vlaneseq
    %v346 = vshrl.u32 %v345, 7
    %v347 = vsub.s32 1, %v346
    %v348 = vrot.slane %v339, %v347
    %v357 = vunpack.c.l.b16 %v333
    %v358 = vunpack.c.h.b16 %v333
    %v359 = vunpack.c.l.b16 %v334
    %v360 = vunpack.c.h.b16 %v334
    %v361 = vunpack.c.l.b16 %v335
    %v362 = vunpack.c.h.b16 %v335
    %v363 = vunpack.c.l.b16 %v336
    %v364 = vunpack.c.h.b16 %v336
    %v365 = vunpack.c.l.b16 %v337
    %v366 = vunpack.c.h.b16 %v337
    %v367 = vunpack.c.l.b16 %v338
    %v368 = vunpack.c.h.b16 %v338
    %v369 = vpack.c.b16 %v359, %v357
    %v370 = vpack.c.b16 %v360, %v358
    %v371 = vpack.c.b16 %v363, %v361
    %v372 = vpack.c.b16 %v364, %v362
    %v373 = vpack.c.b16 %v367, %v365
    %v374 = vpack.c.b16 %v368, %v366
    %v382 = vsel %vm288, %v332, 0
    %384 = vmatprep.subr.bf16.mxu0 %v370
    %385 = vmatpush1.bf16.msra.mxu0 %v369
    %386 = vmatprep.subr.bf16.mxu0 %v372
    %387 = vmatpush1.bf16.msra.mxu0 %v371
    %388 = vmatprep.subr.bf16.mxu0 %v374
    %389 = vmatpush1.bf16.msra.mxu0 %v373
    %390 = vmatprep.subr.bf16.mxu0 0
    %391 = vmatpush1.bf16.msra.mxu0 0
    %392 = vmatprep.subr.bf16.mxu0 0
    %393 = vmatpush1.bf16.msra.mxu0 0
    %394 = vmatprep.subr.bf16.mxu0 0
    %395 = vmatpush1.bf16.msra.mxu0 0
    %396 = vmatprep.subr.bf16.mxu0 0
    %397 = vmatpush1.bf16.msra.mxu0 0
    %398 = vmatprep.subr.bf16.mxu0 0
    %399 = vmatpush1.bf16.msra.mxu0 0
    %400 = vmatprep.subr.bf16.mxu0 0
    %401 = vmatpush1.bf16.msra.mxu0 0
    %402 = vmatprep.subr.bf16.mxu0 0
    %403 = vmatpush1.bf16.msra.mxu0 0
    %404 = vmatprep.subr.bf16.mxu0 0
    %405 = vmatpush1.bf16.msra.mxu0 0
    %406 = vmatprep.subr.bf16.mxu0 0
    %407 = vmatpush1.bf16.msra.mxu0 0
    %408 = vmatprep.subr.bf16.mxu0 0
    %409 = vmatpush1.bf16.msra.mxu0 0
    %410 = vmatprep.subr.bf16.mxu0 0
    %411 = vmatpush1.bf16.msra.mxu0 0
    %412 = vmatprep.subr.bf16.mxu0 0
    %413 = vmatpush1.bf16.msra.mxu0 0
    %414 = vmatprep.subr.bf16.mxu0 0
    %415 = vmatpush1.bf16.msra.mxu0 0
    %416 = vmatprep.mubr.bf16.mxu0 0
    %417 = vmatmul.mubr.bf16.gmra.mrb[0].mxu0 %v382
    %v418 = vpop.f32.mrb[0].mxu0
    %v419 = vadd.f32 %v344, %v418
    %v420 = vpop.f32.mrb[0].mxu0
    %v421 = vadd.f32 %v348, %v420
    %v422 = vpop.f32.mrb[0].mxu0
    %v423 = vadd.f32 %v344, %v422
    %v424 = vpop.f32.mrb[0].mxu0
    %v425 = vadd.f32 %v348, %v424
    %426 = vdwg.mxu0
    %v427 = vpack.c.bf16 %v419, %v419
    %429 = vrot.lane.b32.xlu0 %v427, 80
    %v430 = vpop.permute.xlu0 %429
    %vm431 = vcmask 130048
    %v433 = vsel %vm431, %v427, 0
    %v436 = vsel %vm431, %v430, 0
    %438 = vmatprep.subr.bf16.mxu0 0
    %439 = vmatpush1.bf16.xpose.msra.mxu0 %v436
    %440 = vmatprep.subr.bf16.mxu0 0
    %441 = vmatpush1.bf16.xpose.msra.mxu0 0
    %442 = vmatprep.subr.bf16.mxu0 0
    %443 = vmatpush1.bf16.xpose.msra.mxu0 0
    %444 = vmatprep.subr.bf16.mxu0 0
    %445 = vmatpush1.bf16.xpose.msra.mxu0 0
    %446 = vmatprep.subr.bf16.mxu0 0
    %447 = vmatpush1.bf16.xpose.msra.mxu0 0
    %448 = vmatprep.subr.bf16.mxu0 0
    %449 = vmatpush1.bf16.xpose.msra.mxu0 0
    %450 = vmatprep.subr.bf16.mxu0 0
    %451 = vmatpush1.bf16.xpose.msra.mxu0 0
    %452 = vmatprep.subr.bf16.mxu0 0
    %453 = vmatpush1.bf16.xpose.msra.mxu0 0
    %454 = vmatprep.subr.bf16.mxu0 0
    %455 = vmatpush1.bf16.xpose.msra.mxu0 0
    %456 = vmatprep.subr.bf16.mxu0 0
    %457 = vmatpush1.bf16.xpose.msra.mxu0 0
    %458 = vmatprep.subr.bf16.mxu0 0
    %459 = vmatpush1.bf16.xpose.msra.mxu0 0
    %460 = vmatprep.subr.bf16.mxu0 0
    %461 = vmatpush1.bf16.xpose.msra.mxu0 0
    %462 = vmatprep.subr.bf16.mxu0 0
    %463 = vmatpush1.bf16.xpose.msra.mxu0 0
    %464 = vmatprep.subr.bf16.mxu0 0
    %465 = vmatpush1.bf16.xpose.msra.mxu0 0
    %466 = vmatprep.subr.bf16.mxu0 0
    %467 = vmatpush1.bf16.xpose.msra.mxu0 0
    %468 = vmatprep.subr.bf16.mxu0 0
    %469 = vmatpush1.bf16.xpose.msra.mxu0 0
    %470 = vmatprep.mubr.bf16.mxu0 0
    %471 = vmatmul.mubr.bf16.gmra.mrb[0].mxu0 %v433
    %v472 = vpop.f32.mrb[0].mxu0
    %v473 = vadd.f32 0.0, %v472
    %v474 = vpop.f32.mrb[0].mxu0
    %v475 = vpop.f32.mrb[0].mxu0
    %v476 = vpop.f32.mrb[0].mxu0
    %477 = vdwg.mxu0
    %v478 = vmul.f32 %v473, 0.25
    %vm479 = vcmask 64512
    %v480 = vsel %vm479, %v478, -inf
    %481 = vmax.xlane.f32.xlu0 %v480
    %v482 = vpop.xlane.xlu0 %481
    %v483 = vsub.f32 %v478, %v482
    %v484 = vmul.f32 %v483, 1.442695
    %v485 = vpow.pop %v484
    %v486 = vsel %vm479, %v485, 0.0
    %487 = vadd.xlane.f32.xlu0 %v486
    %v488 = vpop.xlane.xlu0 %487
    %v489 = vrcp.pop %v488
    %v490 = vmul.f32 %v485, %v489
    %v491 = vpack.c.bf16 %v490, %v490
    %492 = vrot.lane.b32.xlu0 %v427, 32
    %v493 = vpop.permute.xlu0 %492
    %v495 = vsel %vm479, %v491, 0
    %vm497 = vcmask 1043456
    %v499 = vsel %vm497, %v493, 0
    %501 = vmatprep.subr.bf16.mxu0 0
    %502 = vmatpush1.bf16.msra.mxu0 %v499
    %503 = vmatprep.subr.bf16.mxu0 0
    %504 = vmatpush1.bf16.msra.mxu0 0
    %505 = vmatprep.subr.bf16.mxu0 0
    %506 = vmatpush1.bf16.msra.mxu0 0
    %507 = vmatprep.subr.bf16.mxu0 0
    %508 = vmatpush1.bf16.msra.mxu0 0
    %509 = vmatprep.subr.bf16.mxu0 0
    %510 = vmatpush1.bf16.msra.mxu0 0
    %511 = vmatprep.subr.bf16.mxu0 0
    %512 = vmatpush1.bf16.msra.mxu0 0
    %513 = vmatprep.subr.bf16.mxu0 0
    %514 = vmatpush1.bf16.msra.mxu0 0
    %515 = vmatprep.subr.bf16.mxu0 0
    %516 = vmatpush1.bf16.msra.mxu0 0
    %517 = vmatprep.subr.bf16.mxu0 0
    %518 = vmatpush1.bf16.msra.mxu0 0
    %519 = vmatprep.subr.bf16.mxu0 0
    %520 = vmatpush1.bf16.msra.mxu0 0
    %521 = vmatprep.subr.bf16.mxu0 0
    %522 = vmatpush1.bf16.msra.mxu0 0
    %523 = vmatprep.subr.bf16.mxu0 0
    %524 = vmatpush1.bf16.msra.mxu0 0
    %525 = vmatprep.subr.bf16.mxu0 0
    %526 = vmatpush1.bf16.msra.mxu0 0
    %527 = vmatprep.subr.bf16.mxu0 0
    %528 = vmatpush1.bf16.msra.mxu0 0
    %529 = vmatprep.subr.bf16.mxu0 0
    %530 = vmatpush1.bf16.msra.mxu0 0
    %531 = vmatprep.subr.bf16.mxu0 0
    %532 = vmatpush1.bf16.msra.mxu0 0
    %533 = vmatprep.mubr.bf16.mxu0 0
    %534 = vmatmul.mubr.bf16.gmra.mrb[0].mxu0 %v495
    %v535 = vpop.f32.mrb[0].mxu0
    %v536 = vadd.f32 0.0, %v535
    %v537 = vpop.f32.mrb[0].mxu0
    %v538 = vpop.f32.mrb[0].mxu0
    %v539 = vpop.f32.mrb[0].mxu0
    %540 = vdwg.mxu0
    %v541 = vpack.c.bf16 %v536, %v536
    %v542 = vld [vmem:[%s9] sm:$0xf]
    %v543 = vld [vmem:[%s9 + $0x4] sm:$0xf]
    %544 = vrot.lane.b32.xlu0 %v427, 112
    %v545 = vpop.permute.xlu0 %544
    %546 = vrot.lane.b32.xlu0 %v427, 64
    %v547 = vpop.permute.xlu0 %546
    %v549 = vsel %vm431, %v545, 0
    %v552 = vsel %vm431, %v547, 0
    %554 = vmatprep.subr.bf16.mxu0 0
    %555 = vmatpush1.bf16.xpose.msra.mxu0 %v552
    %556 = vmatprep.subr.bf16.mxu0 0
    %557 = vmatpush1.bf16.xpose.msra.mxu0 0
    %558 = vmatprep.subr.bf16.mxu0 0
    %559 = vmatpush1.bf16.xpose.msra.mxu0 0
    %560 = vmatprep.subr.bf16.mxu0 0
    %561 = vmatpush1.bf16.xpose.msra.mxu0 0
    %562 = vmatprep.subr.bf16.mxu0 0
    %563 = vmatpush1.bf16.xpose.msra.mxu0 0
    %564 = vmatprep.subr.bf16.mxu0 0
    %565 = vmatpush1.bf16.xpose.msra.mxu0 0
    %566 = vmatprep.subr.bf16.mxu0 0
    %567 = vmatpush1.bf16.xpose.msra.mxu0 0
    %568 = vmatprep.subr.bf16.mxu0 0
    %569 = vmatpush1.bf16.xpose.msra.mxu0 0
    %570 = vmatprep.subr.bf16.mxu0 0
    %571 = vmatpush1.bf16.xpose.msra.mxu0 0
    %572 = vmatprep.subr.bf16.mxu0 0
    %573 = vmatpush1.bf16.xpose.msra.mxu0 0
    %574 = vmatprep.subr.bf16.mxu0 0
    %575 = vmatpush1.bf16.xpose.msra.mxu0 0
    %576 = vmatprep.subr.bf16.mxu0 0
    %577 = vmatpush1.bf16.xpose.msra.mxu0 0
    %578 = vmatprep.subr.bf16.mxu0 0
    %579 = vmatpush1.bf16.xpose.msra.mxu0 0
    %580 = vmatprep.subr.bf16.mxu0 0
    %581 = vmatpush1.bf16.xpose.msra.mxu0 0
    %582 = vmatprep.subr.bf16.mxu0 0
    %583 = vmatpush1.bf16.xpose.msra.mxu0 0
    %584 = vmatprep.subr.bf16.mxu0 0
    %585 = vmatpush1.bf16.xpose.msra.mxu0 0
    %586 = vmatprep.mubr.bf16.mxu0 0
    %587 = vmatmul.mubr.bf16.gmra.mrb[0].mxu0 %v549
    %v588 = vpop.f32.mrb[0].mxu0
    %v589 = vadd.f32 0.0, %v588
    %v590 = vpop.f32.mrb[0].mxu0
    %v591 = vpop.f32.mrb[0].mxu0
    %v592 = vpop.f32.mrb[0].mxu0
    %593 = vdwg.mxu0
    %v594 = vmul.f32 %v589, 0.25
    %v595 = vsel %vm479, %v594, -inf
    %596 = vmax.xlane.f32.xlu0 %v595
    %v597 = vpop.xlane.xlu0 %596
    %v598 = vsub.f32 %v594, %v597
    %v599 = vmul.f32 %v598, 1.442695
    %v600 = vpow.pop %v599
    %v601 = vsel %vm479, %v600, 0.0
    %602 = vadd.xlane.f32.xlu0 %v601
    %v603 = vpop.xlane.xlu0 %602
    %v604 = vrcp.pop %v603
    %v605 = vmul.f32 %v600, %v604
    %v606 = vpack.c.bf16 %v605, %v605
    %607 = vrot.lane.b32.xlu0 %v427, 16
    %v608 = vpop.permute.xlu0 %607
    %v610 = vsel %vm479, %v606, 0
    %v613 = vsel %vm497, %v608, 0
    %615 = vmatprep.subr.bf16.mxu0 0
    %616 = vmatpush1.bf16.msra.mxu0 %v613
    %617 = vmatprep.subr.bf16.mxu0 0
    %618 = vmatpush1.bf16.msra.mxu0 0
    %619 = vmatprep.subr.bf16.mxu0 0
    %620 = vmatpush1.bf16.msra.mxu0 0
    %621 = vmatprep.subr.bf16.mxu0 0
    %622 = vmatpush1.bf16.msra.mxu0 0
    %623 = vmatprep.subr.bf16.mxu0 0
    %624 = vmatpush1.bf16.msra.mxu0 0
    %625 = vmatprep.subr.bf16.mxu0 0
    %626 = vmatpush1.bf16.msra.mxu0 0
    %627 = vmatprep.subr.bf16.mxu0 0
    %628 = vmatpush1.bf16.msra.mxu0 0
    %629 = vmatprep.subr.bf16.mxu0 0
    %630 = vmatpush1.bf16.msra.mxu0 0
    %631 = vmatprep.subr.bf16.mxu0 0
    %632 = vmatpush1.bf16.msra.mxu0 0
    %633 = vmatprep.subr.bf16.mxu0 0
    %634 = vmatpush1.bf16.msra.mxu0 0
    %635 = vmatprep.subr.bf16.mxu0 0
    %636 = vmatpush1.bf16.msra.mxu0 0
    %637 = vmatprep.subr.bf16.mxu0 0
    %638 = vmatpush1.bf16.msra.mxu0 0
    %639 = vmatprep.subr.bf16.mxu0 0
    %640 = vmatpush1.bf16.msra.mxu0 0
    %641 = vmatprep.subr.bf16.mxu0 0
    %642 = vmatpush1.bf16.msra.mxu0 0
    %643 = vmatprep.subr.bf16.mxu0 0
    %644 = vmatpush1.bf16.msra.mxu0 0
    %645 = vmatprep.subr.bf16.mxu0 0
    %646 = vmatpush1.bf16.msra.mxu0 0
    %647 = vmatprep.mubr.bf16.mxu0 0
    %648 = vmatmul.mubr.bf16.gmra.mrb[0].mxu0 %v610
    %v649 = vpop.f32.mrb[0].mxu0
    %v650 = vadd.f32 0.0, %v649
    %v651 = vpop.f32.mrb[0].mxu0
    %v652 = vpop.f32.mrb[0].mxu0
    %v653 = vpop.f32.mrb[0].mxu0
    %654 = vdwg.mxu0
    %v655 = vpack.c.bf16 %v650, %v650
    %v656 = vld [vmem:[%s9 + $0x8] sm:$0xf]
    %v657 = vld [vmem:[%s9 + $0xc] sm:$0xf]
    %v660 = vunpack.c.l.b16 %v656
    %v661 = vunpack.c.l.b16 %v657
    %v662 = vpack.c.b16 %v661, %v660
    %v665 = vsel %vm431, %v655, 0
    %667 = vmatprep.subr.bf16.mxu0 0
    %668 = vmatpush1.bf16.msra.mxu0 %v662
    %669 = vmatprep.subr.bf16.mxu0 0
    %670 = vmatpush1.bf16.msra.mxu0 0
    %671 = vmatprep.subr.bf16.mxu0 0
    %672 = vmatpush1.bf16.msra.mxu0 0
    %673 = vmatprep.subr.bf16.mxu0 0
    %674 = vmatpush1.bf16.msra.mxu0 0
    %675 = vmatprep.subr.bf16.mxu0 0
    %676 = vmatpush1.bf16.msra.mxu0 0
    %677 = vmatprep.subr.bf16.mxu0 0
    %678 = vmatpush1.bf16.msra.mxu0 0
    %679 = vmatprep.subr.bf16.mxu0 0
    %680 = vmatpush1.bf16.msra.mxu0 0
    %681 = vmatprep.subr.bf16.mxu0 0
    %682 = vmatpush1.bf16.msra.mxu0 0
    %683 = vmatprep.subr.bf16.mxu0 0
    %684 = vmatpush1.bf16.msra.mxu0 0
    %685 = vmatprep.subr.bf16.mxu0 0
    %686 = vmatpush1.bf16.msra.mxu0 0
    %687 = vmatprep.subr.bf16.mxu0 0
    %688 = vmatpush1.bf16.msra.mxu0 0
    %689 = vmatprep.subr.bf16.mxu0 0
    %690 = vmatpush1.bf16.msra.mxu0 0
    %691 = vmatprep.subr.bf16.mxu0 0
    %692 = vmatpush1.bf16.msra.mxu0 0
    %693 = vmatprep.subr.bf16.mxu0 0
    %694 = vmatpush1.bf16.msra.mxu0 0
    %695 = vmatprep.subr.bf16.mxu0 0
    %696 = vmatpush1.bf16.msra.mxu0 0
    %697 = vmatprep.subr.bf16.mxu0 0
    %698 = vmatpush1.bf16.msra.mxu0 0
    %699 = vmatprep.mubr.bf16.mxu0 0
    %700 = vmatmul.mubr.bf16.gmra.mrb[0].mxu0 %v665
    %v701 = vpop.f32.mrb[0].mxu0
    %v702 = vadd.f32 0.0, %v701
    %v703 = vpop.f32.mrb[0].mxu0
    %v704 = vpop.f32.mrb[0].mxu0
    %v705 = vpop.f32.mrb[0].mxu0
    %706 = vdwg.mxu0
    %v709 = vunpack.c.l.b16 %v542
    %v710 = vunpack.c.l.b16 %v543
    %v711 = vpack.c.b16 %v710, %v709
    %v714 = vsel %vm431, %v541, 0
    %716 = vmatprep.subr.bf16.mxu0 0
    %717 = vmatpush1.bf16.msra.mxu0 %v711
    %718 = vmatprep.subr.bf16.mxu0 0
    %719 = vmatpush1.bf16.msra.mxu0 0
    %720 = vmatprep.subr.bf16.mxu0 0
    %721 = vmatpush1.bf16.msra.mxu0 0
    %722 = vmatprep.subr.bf16.mxu0 0
    %723 = vmatpush1.bf16.msra.mxu0 0
    %724 = vmatprep.subr.bf16.mxu0 0
    %725 = vmatpush1.bf16.msra.mxu0 0
    %726 = vmatprep.subr.bf16.mxu0 0
    %727 = vmatpush1.bf16.msra.mxu0 0
    %728 = vmatprep.subr.bf16.mxu0 0
    %729 = vmatpush1.bf16.msra.mxu0 0
    %730 = vmatprep.subr.bf16.mxu0 0
    %731 = vmatpush1.bf16.msra.mxu0 0
    %732 = vmatprep.subr.bf16.mxu0 0
    %733 = vmatpush1.bf16.msra.mxu0 0
    %734 = vmatprep.subr.bf16.mxu0 0
    %735 = vmatpush1.bf16.msra.mxu0 0
    %736 = vmatprep.subr.bf16.mxu0 0
    %737 = vmatpush1.bf16.msra.mxu0 0
    %738 = vmatprep.subr.bf16.mxu0 0
    %739 = vmatpush1.bf16.msra.mxu0 0
    %740 = vmatprep.subr.bf16.mxu0 0
    %741 = vmatpush1.bf16.msra.mxu0 0
    %742 = vmatprep.subr.bf16.mxu0 0
    %743 = vmatpush1.bf16.msra.mxu0 0
    %744 = vmatprep.subr.bf16.mxu0 0
    %745 = vmatpush1.bf16.msra.mxu0 0
    %746 = vmatprep.subr.bf16.mxu0 0
    %747 = vmatpush1.bf16.msra.mxu0 0
    %748 = vmatprep.mubr.bf16.mxu0 0
    %749 = vmatmul.mubr.bf16.gmra.mrb[0].mxu0 %v714
    %v750 = vpop.f32.mrb[0].mxu0
    %v751 = vadd.f32 %v702, %v750
    %v752 = vpop.f32.mrb[0].mxu0
    %v753 = vpop.f32.mrb[0].mxu0
    %v754 = vpop.f32.mrb[0].mxu0
    %755 = vdwg.mxu0
    %v756 = vpack.c.bf16 %v421, %v421
    %757 = vrot.lane.b32.xlu0 %v427, 96
    %v758 = vpop.permute.xlu0 %757
    %759 = vrot.lane.b32.xlu0 %v427, 48
    %v760 = vpop.permute.xlu0 %759
    %v762 = vsel %vm431, %v758, 0
    %v765 = vsel %vm431, %v760, 0
    %767 = vmatprep.subr.bf16.mxu0 0
    %768 = vmatpush1.bf16.xpose.msra.mxu0 %v765
    %769 = vmatprep.subr.bf16.mxu0 0
    %770 = vmatpush1.bf16.xpose.msra.mxu0 0
    %771 = vmatprep.subr.bf16.mxu0 0
    %772 = vmatpush1.bf16.xpose.msra.mxu0 0
    %773 = vmatprep.subr.bf16.mxu0 0
    %774 = vmatpush1.bf16.xpose.msra.mxu0 0
    %775 = vmatprep.subr.bf16.mxu0 0
    %776 = vmatpush1.bf16.xpose.msra.mxu0 0
    %777 = vmatprep.subr.bf16.mxu0 0
    %778 = vmatpush1.bf16.xpose.msra.mxu0 0
    %779 = vmatprep.subr.bf16.mxu0 0
    %780 = vmatpush1.bf16.xpose.msra.mxu0 0
    %781 = vmatprep.subr.bf16.mxu0 0
    %782 = vmatpush1.bf16.xpose.msra.mxu0 0
    %783 = vmatprep.subr.bf16.mxu0 0
    %784 = vmatpush1.bf16.xpose.msra.mxu0 0
    %785 = vmatprep.subr.bf16.mxu0 0
    %786 = vmatpush1.bf16.xpose.msra.mxu0 0
    %787 = vmatprep.subr.bf16.mxu0 0
    %788 = vmatpush1.bf16.xpose.msra.mxu0 0
    %789 = vmatprep.subr.bf16.mxu0 0
    %790 = vmatpush1.bf16.xpose.msra.mxu0 0
    %791 = vmatprep.subr.bf16.mxu0 0
    %792 = vmatpush1.bf16.xpose.msra.mxu0 0
    %793 = vmatprep.subr.bf16.mxu0 0
    %794 = vmatpush1.bf16.xpose.msra.mxu0 0
    %795 = vmatprep.subr.bf16.mxu0 0
    %796 = vmatpush1.bf16.xpose.msra.mxu0 0
    %797 = vmatprep.subr.bf16.mxu0 0
    %798 = vmatpush1.bf16.xpose.msra.mxu0 0
    %799 = vmatprep.mubr.bf16.mxu0 0
    %800 = vmatmul.mubr.bf16.gmra.mrb[0].mxu0 %v762
    %v801 = vpop.f32.mrb[0].mxu0
    %v802 = vadd.f32 0.0, %v801
    %v803 = vpop.f32.mrb[0].mxu0
    %v804 = vpop.f32.mrb[0].mxu0
    %v805 = vpop.f32.mrb[0].mxu0
    %806 = vdwg.mxu0
    %v807 = vmul.f32 %v802, 0.25
    %v808 = vsel %vm479, %v807, -inf
    %809 = vmax.xlane.f32.xlu0 %v808
    %v810 = vpop.xlane.xlu0 %809
    %v811 = vsub.f32 %v807, %v810
    %v812 = vmul.f32 %v811, 1.442695
    %v813 = vpow.pop %v812
    %v814 = vsel %vm479, %v813, 0.0
    %815 = vadd.xlane.f32.xlu0 %v814
    %v816 = vpop.xlane.xlu0 %815
    %v817 = vrcp.pop %v816
    %v818 = vmul.f32 %v813, %v817
    %v819 = vpack.c.bf16 %v818, %v818
    %v821 = vsel %vm479, %v819, 0
    %v824 = vsel %vm497, %v756, 0
    %826 = vmatprep.subr.bf16.mxu0 0
    %827 = vmatpush1.bf16.msra.mxu0 %v824
    %828 = vmatprep.subr.bf16.mxu0 0
    %829 = vmatpush1.bf16.msra.mxu0 0
    %830 = vmatprep.subr.bf16.mxu0 0
    %831 = vmatpush1.bf16.msra.mxu0 0
    %832 = vmatprep.subr.bf16.mxu0 0
    %833 = vmatpush1.bf16.msra.mxu0 0
    %834 = vmatprep.subr.bf16.mxu0 0
    %835 = vmatpush1.bf16.msra.mxu0 0
    %836 = vmatprep.subr.bf16.mxu0 0
    %837 = vmatpush1.bf16.msra.mxu0 0
    %838 = vmatprep.subr.bf16.mxu0 0
    %839 = vmatpush1.bf16.msra.mxu0 0
    %840 = vmatprep.subr.bf16.mxu0 0
    %841 = vmatpush1.bf16.msra.mxu0 0
    %842 = vmatprep.subr.bf16.mxu0 0
    %843 = vmatpush1.bf16.msra.mxu0 0
    %844 = vmatprep.subr.bf16.mxu0 0
    %845 = vmatpush1.bf16.msra.mxu0 0
    %846 = vmatprep.subr.bf16.mxu0 0
    %847 = vmatpush1.bf16.msra.mxu0 0
    %848 = vmatprep.subr.bf16.mxu0 0
    %849 = vmatpush1.bf16.msra.mxu0 0
    %850 = vmatprep.subr.bf16.mxu0 0
    %851 = vmatpush1.bf16.msra.mxu0 0
    %852 = vmatprep.subr.bf16.mxu0 0
    %853 = vmatpush1.bf16.msra.mxu0 0
    %854 = vmatprep.subr.bf16.mxu0 0
    %855 = vmatpush1.bf16.msra.mxu0 0
    %856 = vmatprep.subr.bf16.mxu0 0
    %857 = vmatpush1.bf16.msra.mxu0 0
    %858 = vmatprep.mubr.bf16.mxu0 0
    %859 = vmatmul.mubr.bf16.gmra.mrb[0].mxu0 %v821
    %v860 = vpop.f32.mrb[0].mxu0
    %v861 = vadd.f32 0.0, %v860
    %v862 = vpop.f32.mrb[0].mxu0
    %v863 = vpop.f32.mrb[0].mxu0
    %v864 = vpop.f32.mrb[0].mxu0
    %865 = vdwg.mxu0
    %v866 = vpack.c.bf16 %v861, %v861
    %v867 = vld [vmem:[%s9 + $0x10] sm:$0xf]
    %v868 = vld [vmem:[%s9 + $0x14] sm:$0xf]
    %v871 = vunpack.c.l.b16 %v867
    %v872 = vunpack.c.l.b16 %v868
    %v873 = vpack.c.b16 %v872, %v871
    %v876 = vsel %vm431, %v866, 0
    %878 = vmatprep.subr.bf16.mxu0 0
    %879 = vmatpush1.bf16.msra.mxu0 %v873
    %880 = vmatprep.subr.bf16.mxu0 0
    %881 = vmatpush1.bf16.msra.mxu0 0
    %882 = vmatprep.subr.bf16.mxu0 0
    %883 = vmatpush1.bf16.msra.mxu0 0
    %884 = vmatprep.subr.bf16.mxu0 0
    %885 = vmatpush1.bf16.msra.mxu0 0
    %886 = vmatprep.subr.bf16.mxu0 0
    %887 = vmatpush1.bf16.msra.mxu0 0
    %888 = vmatprep.subr.bf16.mxu0 0
    %889 = vmatpush1.bf16.msra.mxu0 0
    %890 = vmatprep.subr.bf16.mxu0 0
    %891 = vmatpush1.bf16.msra.mxu0 0
    %892 = vmatprep.subr.bf16.mxu0 0
    %893 = vmatpush1.bf16.msra.mxu0 0
    %894 = vmatprep.subr.bf16.mxu0 0
    %895 = vmatpush1.bf16.msra.mxu0 0
    %896 = vmatprep.subr.bf16.mxu0 0
    %897 = vmatpush1.bf16.msra.mxu0 0
    %898 = vmatprep.subr.bf16.mxu0 0
    %899 = vmatpush1.bf16.msra.mxu0 0
    %900 = vmatprep.subr.bf16.mxu0 0
    %901 = vmatpush1.bf16.msra.mxu0 0
    %902 = vmatprep.subr.bf16.mxu0 0
    %903 = vmatpush1.bf16.msra.mxu0 0
    %904 = vmatprep.subr.bf16.mxu0 0
    %905 = vmatpush1.bf16.msra.mxu0 0
    %906 = vmatprep.subr.bf16.mxu0 0
    %907 = vmatpush1.bf16.msra.mxu0 0
    %908 = vmatprep.subr.bf16.mxu0 0
    %909 = vmatpush1.bf16.msra.mxu0 0
    %910 = vmatprep.mubr.bf16.mxu0 0
    %911 = vmatmul.mubr.bf16.gmra.mrb[0].mxu0 %v876
    %v912 = vpop.f32.mrb[0].mxu0
    %v913 = vadd.f32 0.0, %v912
    %v914 = vpop.f32.mrb[0].mxu0
    %v915 = vpop.f32.mrb[0].mxu0
    %v916 = vpop.f32.mrb[0].mxu0
    %917 = vdwg.mxu0
    %v918 = vadd.f32 %v751, %v913
    %v919 = vpack.c.bf16 %v423, %v423
    %921 = vrot.lane.b32.xlu0 %v919, 80
    %v922 = vpop.permute.xlu0 %921
    %v924 = vsel %vm431, %v919, 0
    %v927 = vsel %vm431, %v922, 0
    %929 = vmatprep.subr.bf16.mxu0 0
    %930 = vmatpush1.bf16.xpose.msra.mxu0 %v927
    %931 = vmatprep.subr.bf16.mxu0 0
    %932 = vmatpush1.bf16.xpose.msra.mxu0 0
    %933 = vmatprep.subr.bf16.mxu0 0
    %934 = vmatpush1.bf16.xpose.msra.mxu0 0
    %935 = vmatprep.subr.bf16.mxu0 0
    %936 = vmatpush1.bf16.xpose.msra.mxu0 0
    %937 = vmatprep.subr.bf16.mxu0 0
    %938 = vmatpush1.bf16.xpose.msra.mxu0 0
    %939 = vmatprep.subr.bf16.mxu0 0
    %940 = vmatpush1.bf16.xpose.msra.mxu0 0
    %941 = vmatprep.subr.bf16.mxu0 0
    %942 = vmatpush1.bf16.xpose.msra.mxu0 0
    %943 = vmatprep.subr.bf16.mxu0 0
    %944 = vmatpush1.bf16.xpose.msra.mxu0 0
    %945 = vmatprep.subr.bf16.mxu0 0
    %946 = vmatpush1.bf16.xpose.msra.mxu0 0
    %947 = vmatprep.subr.bf16.mxu0 0
    %948 = vmatpush1.bf16.xpose.msra.mxu0 0
    %949 = vmatprep.subr.bf16.mxu0 0
    %950 = vmatpush1.bf16.xpose.msra.mxu0 0
    %951 = vmatprep.subr.bf16.mxu0 0
    %952 = vmatpush1.bf16.xpose.msra.mxu0 0
    %953 = vmatprep.subr.bf16.mxu0 0
    %954 = vmatpush1.bf16.xpose.msra.mxu0 0
    %955 = vmatprep.subr.bf16.mxu0 0
    %956 = vmatpush1.bf16.xpose.msra.mxu0 0
    %957 = vmatprep.subr.bf16.mxu0 0
    %958 = vmatpush1.bf16.xpose.msra.mxu0 0
    %959 = vmatprep.subr.bf16.mxu0 0
    %960 = vmatpush1.bf16.xpose.msra.mxu0 0
    %961 = vmatprep.mubr.bf16.mxu0 0
    %962 = vmatmul.mubr.bf16.gmra.mrb[0].mxu0 %v924
    %v963 = vpop.f32.mrb[0].mxu0
    %v964 = vadd.f32 0.0, %v963
    %v965 = vpop.f32.mrb[0].mxu0
    %v966 = vpop.f32.mrb[0].mxu0
    %v967 = vpop.f32.mrb[0].mxu0
    %968 = vdwg.mxu0
    %v969 = vmul.f32 %v964, 0.25
    %v970 = vsel %vm479, %v969, -inf
    %971 = vmax.xlane.f32.xlu0 %v970
    %v972 = vpop.xlane.xlu0 %971
    %v973 = vsub.f32 %v969, %v972
    %v974 = vmul.f32 %v973, 1.442695
    %v975 = vpow.pop %v974
    %v976 = vsel %vm479, %v975, 0.0
    %977 = vadd.xlane.f32.xlu0 %v976
    %v978 = vpop.xlane.xlu0 %977
    %v979 = vrcp.pop %v978
    %v980 = vmul.f32 %v975, %v979
    %v981 = vpack.c.bf16 %v980, %v980
    %982 = vrot.lane.b32.xlu0 %v919, 32
    %v983 = vpop.permute.xlu0 %982
    %v985 = vsel %vm479, %v981, 0
    %v988 = vsel %vm497, %v983, 0
    %990 = vmatprep.subr.bf16.mxu0 0
    %991 = vmatpush1.bf16.msra.mxu0 %v988
    %992 = vmatprep.subr.bf16.mxu0 0
    %993 = vmatpush1.bf16.msra.mxu0 0
    %994 = vmatprep.subr.bf16.mxu0 0
    %995 = vmatpush1.bf16.msra.mxu0 0
    %996 = vmatprep.subr.bf16.mxu0 0
    %997 = vmatpush1.bf16.msra.mxu0 0
    %998 = vmatprep.subr.bf16.mxu0 0
    %999 = vmatpush1.bf16.msra.mxu0 0
    %1000 = vmatprep.subr.bf16.mxu0 0
    %1001 = vmatpush1.bf16.msra.mxu0 0
    %1002 = vmatprep.subr.bf16.mxu0 0
    %1003 = vmatpush1.bf16.msra.mxu0 0
    %1004 = vmatprep.subr.bf16.mxu0 0
    %1005 = vmatpush1.bf16.msra.mxu0 0
    %1006 = vmatprep.subr.bf16.mxu0 0
    %1007 = vmatpush1.bf16.msra.mxu0 0
    %1008 = vmatprep.subr.bf16.mxu0 0
    %1009 = vmatpush1.bf16.msra.mxu0 0
    %1010 = vmatprep.subr.bf16.mxu0 0
    %1011 = vmatpush1.bf16.msra.mxu0 0
    %1012 = vmatprep.subr.bf16.mxu0 0
    %1013 = vmatpush1.bf16.msra.mxu0 0
    %1014 = vmatprep.subr.bf16.mxu0 0
    %1015 = vmatpush1.bf16.msra.mxu0 0
    %1016 = vmatprep.subr.bf16.mxu0 0
    %1017 = vmatpush1.bf16.msra.mxu0 0
    %1018 = vmatprep.subr.bf16.mxu0 0
    %1019 = vmatpush1.bf16.msra.mxu0 0
    %1020 = vmatprep.subr.bf16.mxu0 0
    %1021 = vmatpush1.bf16.msra.mxu0 0
    %1022 = vmatprep.mubr.bf16.mxu0 0
    %1023 = vmatmul.mubr.bf16.gmra.mrb[0].mxu0 %v985
    %v1024 = vpop.f32.mrb[0].mxu0
    %v1025 = vadd.f32 0.0, %v1024
    %v1026 = vpop.f32.mrb[0].mxu0
    %v1027 = vpop.f32.mrb[0].mxu0
    %v1028 = vpop.f32.mrb[0].mxu0
    %1029 = vdwg.mxu0
    %v1030 = vpack.c.bf16 %v1025, %v1025
    %1031 = vrot.lane.b32.xlu0 %v919, 112
    %v1032 = vpop.permute.xlu0 %1031
    %1033 = vrot.lane.b32.xlu0 %v919, 64
    %v1034 = vpop.permute.xlu0 %1033
    %v1036 = vsel %vm431, %v1032, 0
    %v1039 = vsel %vm431, %v1034, 0
    %1041 = vmatprep.subr.bf16.mxu0 0
    %1042 = vmatpush1.bf16.xpose.msra.mxu0 %v1039
    %1043 = vmatprep.subr.bf16.mxu0 0
    %1044 = vmatpush1.bf16.xpose.msra.mxu0 0
    %1045 = vmatprep.subr.bf16.mxu0 0
    %1046 = vmatpush1.bf16.xpose.msra.mxu0 0
    %1047 = vmatprep.subr.bf16.mxu0 0
    %1048 = vmatpush1.bf16.xpose.msra.mxu0 0
    %1049 = vmatprep.subr.bf16.mxu0 0
    %1050 = vmatpush1.bf16.xpose.msra.mxu0 0
    %1051 = vmatprep.subr.bf16.mxu0 0
    %1052 = vmatpush1.bf16.xpose.msra.mxu0 0
    %1053 = vmatprep.subr.bf16.mxu0 0
    %1054 = vmatpush1.bf16.xpose.msra.mxu0 0
    %1055 = vmatprep.subr.bf16.mxu0 0
    %1056 = vmatpush1.bf16.xpose.msra.mxu0 0
    %1057 = vmatprep.subr.bf16.mxu0 0
    %1058 = vmatpush1.bf16.xpose.msra.mxu0 0
    %1059 = vmatprep.subr.bf16.mxu0 0
    %1060 = vmatpush1.bf16.xpose.msra.mxu0 0
    %1061 = vmatprep.subr.bf16.mxu0 0
    %1062 = vmatpush1.bf16.xpose.msra.mxu0 0
    %1063 = vmatprep.subr.bf16.mxu0 0
    %1064 = vmatpush1.bf16.xpose.msra.mxu0 0
    %1065 = vmatprep.subr.bf16.mxu0 0
    %1066 = vmatpush1.bf16.xpose.msra.mxu0 0
    %1067 = vmatprep.subr.bf16.mxu0 0
    %1068 = vmatpush1.bf16.xpose.msra.mxu0 0
    %1069 = vmatprep.subr.bf16.mxu0 0
    %1070 = vmatpush1.bf16.xpose.msra.mxu0 0
    %1071 = vmatprep.subr.bf16.mxu0 0
    %1072 = vmatpush1.bf16.xpose.msra.mxu0 0
    %1073 = vmatprep.mubr.bf16.mxu0 0
    %1074 = vmatmul.mubr.bf16.gmra.mrb[0].mxu0 %v1036
    %v1075 = vpop.f32.mrb[0].mxu0
    %v1076 = vadd.f32 0.0, %v1075
    %v1077 = vpop.f32.mrb[0].mxu0
    %v1078 = vpop.f32.mrb[0].mxu0
    %v1079 = vpop.f32.mrb[0].mxu0
    %1080 = vdwg.mxu0
    %v1081 = vmul.f32 %v1076, 0.25
    %v1082 = vsel %vm479, %v1081, -inf
    %1083 = vmax.xlane.f32.xlu0 %v1082
    %v1084 = vpop.xlane.xlu0 %1083
    %v1085 = vsub.f32 %v1081, %v1084
    %v1086 = vmul.f32 %v1085, 1.442695
    %v1087 = vpow.pop %v1086
    %v1088 = vsel %vm479, %v1087, 0.0
    %1089 = vadd.xlane.f32.xlu0 %v1088
    %v1090 = vpop.xlane.xlu0 %1089
    %v1091 = vrcp.pop %v1090
    %v1092 = vmul.f32 %v1087, %v1091
    %v1093 = vpack.c.bf16 %v1092, %v1092
    %1094 = vrot.lane.b32.xlu0 %v919, 16
    %v1095 = vpop.permute.xlu0 %1094
    %v1097 = vsel %vm479, %v1093, 0
    %v1100 = vsel %vm497, %v1095, 0
    %1102 = vmatprep.subr.bf16.mxu0 0
    %1103 = vmatpush1.bf16.msra.mxu0 %v1100
    %1104 = vmatprep.subr.bf16.mxu0 0
    %1105 = vmatpush1.bf16.msra.mxu0 0
    %1106 = vmatprep.subr.bf16.mxu0 0
    %1107 = vmatpush1.bf16.msra.mxu0 0
    %1108 = vmatprep.subr.bf16.mxu0 0
    %1109 = vmatpush1.bf16.msra.mxu0 0
    %1110 = vmatprep.subr.bf16.mxu0 0
    %1111 = vmatpush1.bf16.msra.mxu0 0
    %1112 = vmatprep.subr.bf16.mxu0 0
    %1113 = vmatpush1.bf16.msra.mxu0 0
    %1114 = vmatprep.subr.bf16.mxu0 0
    %1115 = vmatpush1.bf16.msra.mxu0 0
    %1116 = vmatprep.subr.bf16.mxu0 0
    %1117 = vmatpush1.bf16.msra.mxu0 0
    %1118 = vmatprep.subr.bf16.mxu0 0
    %1119 = vmatpush1.bf16.msra.mxu0 0
    %1120 = vmatprep.subr.bf16.mxu0 0
    %1121 = vmatpush1.bf16.msra.mxu0 0
    %1122 = vmatprep.subr.bf16.mxu0 0
    %1123 = vmatpush1.bf16.msra.mxu0 0
    %1124 = vmatprep.subr.bf16.mxu0 0
    %1125 = vmatpush1.bf16.msra.mxu0 0
    %1126 = vmatprep.subr.bf16.mxu0 0
    %1127 = vmatpush1.bf16.msra.mxu0 0
    %1128 = vmatprep.subr.bf16.mxu0 0
    %1129 = vmatpush1.bf16.msra.mxu0 0
    %1130 = vmatprep.subr.bf16.mxu0 0
    %1131 = vmatpush1.bf16.msra.mxu0 0
    %1132 = vmatprep.subr.bf16.mxu0 0
    %1133 = vmatpush1.bf16.msra.mxu0 0
    %1134 = vmatprep.mubr.bf16.mxu0 0
    %1135 = vmatmul.mubr.bf16.gmra.mrb[0].mxu0 %v1097
    %v1136 = vpop.f32.mrb[0].mxu0
    %v1137 = vadd.f32 0.0, %v1136
    %v1138 = vpop.f32.mrb[0].mxu0
    %v1139 = vpop.f32.mrb[0].mxu0
    %v1140 = vpop.f32.mrb[0].mxu0
    %1141 = vdwg.mxu0
    %v1142 = vpack.c.bf16 %v1137, %v1137
    %v1144 = vsel %vm431, %v1142, 0
    %1146 = vmatprep.subr.bf16.mxu0 0
    %1147 = vmatpush1.bf16.msra.mxu0 %v662
    %1148 = vmatprep.subr.bf16.mxu0 0
    %1149 = vmatpush1.bf16.msra.mxu0 0
    %1150 = vmatprep.subr.bf16.mxu0 0
    %1151 = vmatpush1.bf16.msra.mxu0 0
    %1152 = vmatprep.subr.bf16.mxu0 0
    %1153 = vmatpush1.bf16.msra.mxu0 0
    %1154 = vmatprep.subr.bf16.mxu0 0
    %1155 = vmatpush1.bf16.msra.mxu0 0
    %1156 = vmatprep.subr.bf16.mxu0 0
    %1157 = vmatpush1.bf16.msra.mxu0 0
    %1158 = vmatprep.subr.bf16.mxu0 0
    %1159 = vmatpush1.bf16.msra.mxu0 0
    %1160 = vmatprep.subr.bf16.mxu0 0
    %1161 = vmatpush1.bf16.msra.mxu0 0
    %1162 = vmatprep.subr.bf16.mxu0 0
    %1163 = vmatpush1.bf16.msra.mxu0 0
    %1164 = vmatprep.subr.bf16.mxu0 0
    %1165 = vmatpush1.bf16.msra.mxu0 0
    %1166 = vmatprep.subr.bf16.mxu0 0
    %1167 = vmatpush1.bf16.msra.mxu0 0
    %1168 = vmatprep.subr.bf16.mxu0 0
    %1169 = vmatpush1.bf16.msra.mxu0 0
    %1170 = vmatprep.subr.bf16.mxu0 0
    %1171 = vmatpush1.bf16.msra.mxu0 0
    %1172 = vmatprep.subr.bf16.mxu0 0
    %1173 = vmatpush1.bf16.msra.mxu0 0
    %1174 = vmatprep.subr.bf16.mxu0 0
    %1175 = vmatpush1.bf16.msra.mxu0 0
    %1176 = vmatprep.subr.bf16.mxu0 0
    %1177 = vmatpush1.bf16.msra.mxu0 0
    %1178 = vmatprep.mubr.bf16.mxu0 0
    %1179 = vmatmul.mubr.bf16.gmra.mrb[0].mxu0 %v1144
    %v1180 = vpop.f32.mrb[0].mxu0
    %v1181 = vadd.f32 0.0, %v1180
    %v1182 = vpop.f32.mrb[0].mxu0
    %v1183 = vpop.f32.mrb[0].mxu0
    %v1184 = vpop.f32.mrb[0].mxu0
    %1185 = vdwg.mxu0
    %v1187 = vsel %vm431, %v1030, 0
    %1189 = vmatprep.subr.bf16.mxu0 0
    %1190 = vmatpush1.bf16.msra.mxu0 %v711
    %1191 = vmatprep.subr.bf16.mxu0 0
    %1192 = vmatpush1.bf16.msra.mxu0 0
    %1193 = vmatprep.subr.bf16.mxu0 0
    %1194 = vmatpush1.bf16.msra.mxu0 0
    %1195 = vmatprep.subr.bf16.mxu0 0
    %1196 = vmatpush1.bf16.msra.mxu0 0
    %1197 = vmatprep.subr.bf16.mxu0 0
    %1198 = vmatpush1.bf16.msra.mxu0 0
    %1199 = vmatprep.subr.bf16.mxu0 0
    %1200 = vmatpush1.bf16.msra.mxu0 0
    %1201 = vmatprep.subr.bf16.mxu0 0
    %1202 = vmatpush1.bf16.msra.mxu0 0
    %1203 = vmatprep.subr.bf16.mxu0 0
    %1204 = vmatpush1.bf16.msra.mxu0 0
    %1205 = vmatprep.subr.bf16.mxu0 0
    %1206 = vmatpush1.bf16.msra.mxu0 0
    %1207 = vmatprep.subr.bf16.mxu0 0
    %1208 = vmatpush1.bf16.msra.mxu0 0
    %1209 = vmatprep.subr.bf16.mxu0 0
    %1210 = vmatpush1.bf16.msra.mxu0 0
    %1211 = vmatprep.subr.bf16.mxu0 0
    %1212 = vmatpush1.bf16.msra.mxu0 0
    %1213 = vmatprep.subr.bf16.mxu0 0
    %1214 = vmatpush1.bf16.msra.mxu0 0
    %1215 = vmatprep.subr.bf16.mxu0 0
    %1216 = vmatpush1.bf16.msra.mxu0 0
    %1217 = vmatprep.subr.bf16.mxu0 0
    %1218 = vmatpush1.bf16.msra.mxu0 0
    %1219 = vmatprep.subr.bf16.mxu0 0
    %1220 = vmatpush1.bf16.msra.mxu0 0
    %1221 = vmatprep.mubr.bf16.mxu0 0
    %1222 = vmatmul.mubr.bf16.gmra.mrb[0].mxu0 %v1187
    %v1223 = vpop.f32.mrb[0].mxu0
    %v1224 = vadd.f32 %v1181, %v1223
    %v1225 = vpop.f32.mrb[0].mxu0
    %v1226 = vpop.f32.mrb[0].mxu0
    %v1227 = vpop.f32.mrb[0].mxu0
    %1228 = vdwg.mxu0
    %v1229 = vpack.c.bf16 %v425, %v425
    %1230 = vrot.lane.b32.xlu0 %v919, 96
    %v1231 = vpop.permute.xlu0 %1230
    %1232 = vrot.lane.b32.xlu0 %v919, 48
    %v1233 = vpop.permute.xlu0 %1232
    %v1235 = vsel %vm431, %v1231, 0
    %v1238 = vsel %vm431, %v1233, 0
    %1240 = vmatprep.subr.bf16.mxu0 0
    %1241 = vmatpush1.bf16.xpose.msra.mxu0 %v1238
    %1242 = vmatprep.subr.bf16.mxu0 0
    %1243 = vmatpush1.bf16.xpose.msra.mxu0 0
    %1244 = vmatprep.subr.bf16.mxu0 0
    %1245 = vmatpush1.bf16.xpose.msra.mxu0 0
    %1246 = vmatprep.subr.bf16.mxu0 0
    %1247 = vmatpush1.bf16.xpose.msra.mxu0 0
    %1248 = vmatprep.subr.bf16.mxu0 0
    %1249 = vmatpush1.bf16.xpose.msra.mxu0 0
    %1250 = vmatprep.subr.bf16.mxu0 0
    %1251 = vmatpush1.bf16.xpose.msra.mxu0 0
    %1252 = vmatprep.subr.bf16.mxu0 0
    %1253 = vmatpush1.bf16.xpose.msra.mxu0 0
    %1254 = vmatprep.subr.bf16.mxu0 0
    %1255 = vmatpush1.bf16.xpose.msra.mxu0 0
    %1256 = vmatprep.subr.bf16.mxu0 0
    %1257 = vmatpush1.bf16.xpose.msra.mxu0 0
    %1258 = vmatprep.subr.bf16.mxu0 0
    %1259 = vmatpush1.bf16.xpose.msra.mxu0 0
    %1260 = vmatprep.subr.bf16.mxu0 0
    %1261 = vmatpush1.bf16.xpose.msra.mxu0 0
    %1262 = vmatprep.subr.bf16.mxu0 0
    %1263 = vmatpush1.bf16.xpose.msra.mxu0 0
    %1264 = vmatprep.subr.bf16.mxu0 0
    %1265 = vmatpush1.bf16.xpose.msra.mxu0 0
    %1266 = vmatprep.subr.bf16.mxu0 0
    %1267 = vmatpush1.bf16.xpose.msra.mxu0 0
    %1268 = vmatprep.subr.bf16.mxu0 0
    %1269 = vmatpush1.bf16.xpose.msra.mxu0 0
    %1270 = vmatprep.subr.bf16.mxu0 0
    %1271 = vmatpush1.bf16.xpose.msra.mxu0 0
    %1272 = vmatprep.mubr.bf16.mxu0 0
    %1273 = vmatmul.mubr.bf16.gmra.mrb[0].mxu0 %v1235
    %v1274 = vpop.f32.mrb[0].mxu0
    %v1275 = vadd.f32 0.0, %v1274
    %v1276 = vpop.f32.mrb[0].mxu0
    %v1277 = vpop.f32.mrb[0].mxu0
    %v1278 = vpop.f32.mrb[0].mxu0
    %1279 = vdwg.mxu0
    %v1280 = vmul.f32 %v1275, 0.25
    %v1281 = vsel %vm479, %v1280, -inf
    %1282 = vmax.xlane.f32.xlu0 %v1281
    %v1283 = vpop.xlane.xlu0 %1282
    %v1284 = vsub.f32 %v1280, %v1283
    %v1285 = vmul.f32 %v1284, 1.442695
    %v1286 = vpow.pop %v1285
    %v1287 = vsel %vm479, %v1286, 0.0
    %1288 = vadd.xlane.f32.xlu0 %v1287
    %v1289 = vpop.xlane.xlu0 %1288
    %v1290 = vrcp.pop %v1289
    %v1291 = vmul.f32 %v1286, %v1290
    %v1292 = vpack.c.bf16 %v1291, %v1291
    %v1294 = vsel %vm479, %v1292, 0
    %v1297 = vsel %vm497, %v1229, 0
    %1299 = vmatprep.subr.bf16.mxu0 0
    %1300 = vmatpush1.bf16.msra.mxu0 %v1297
    %1301 = vmatprep.subr.bf16.mxu0 0
    %1302 = vmatpush1.bf16.msra.mxu0 0
    %1303 = vmatprep.subr.bf16.mxu0 0
    %1304 = vmatpush1.bf16.msra.mxu0 0
    %1305 = vmatprep.subr.bf16.mxu0 0
    %1306 = vmatpush1.bf16.msra.mxu0 0
    %1307 = vmatprep.subr.bf16.mxu0 0
    %1308 = vmatpush1.bf16.msra.mxu0 0
    %1309 = vmatprep.subr.bf16.mxu0 0
    %1310 = vmatpush1.bf16.msra.mxu0 0
    %1311 = vmatprep.subr.bf16.mxu0 0
    %1312 = vmatpush1.bf16.msra.mxu0 0
    %1313 = vmatprep.subr.bf16.mxu0 0
    %1314 = vmatpush1.bf16.msra.mxu0 0
    %1315 = vmatprep.subr.bf16.mxu0 0
    %1316 = vmatpush1.bf16.msra.mxu0 0
    %1317 = vmatprep.subr.bf16.mxu0 0
    %1318 = vmatpush1.bf16.msra.mxu0 0
    %1319 = vmatprep.subr.bf16.mxu0 0
    %1320 = vmatpush1.bf16.msra.mxu0 0
    %1321 = vmatprep.subr.bf16.mxu0 0
    %1322 = vmatpush1.bf16.msra.mxu0 0
    %1323 = vmatprep.subr.bf16.mxu0 0
    %1324 = vmatpush1.bf16.msra.mxu0 0
    %1325 = vmatprep.subr.bf16.mxu0 0
    %1326 = vmatpush1.bf16.msra.mxu0 0
    %1327 = vmatprep.subr.bf16.mxu0 0
    %1328 = vmatpush1.bf16.msra.mxu0 0
    %1329 = vmatprep.subr.bf16.mxu0 0
    %1330 = vmatpush1.bf16.msra.mxu0 0
    %1331 = vmatprep.mubr.bf16.mxu0 0
    %1332 = vmatmul.mubr.bf16.gmra.mrb[0].mxu0 %v1294
    %v1333 = vpop.f32.mrb[0].mxu0
    %v1334 = vadd.f32 0.0, %v1333
    %v1335 = vpop.f32.mrb[0].mxu0
    %v1336 = vpop.f32.mrb[0].mxu0
    %v1337 = vpop.f32.mrb[0].mxu0
    %1338 = vdwg.mxu0
    %v1339 = vpack.c.bf16 %v1334, %v1334
    %v1341 = vsel %vm431, %v1339, 0
    %1343 = vmatprep.subr.bf16.mxu0 0
    %1344 = vmatpush1.bf16.msra.mxu0 %v873
    %1345 = vmatprep.subr.bf16.mxu0 0
    %1346 = vmatpush1.bf16.msra.mxu0 0
    %1347 = vmatprep.subr.bf16.mxu0 0
    %1348 = vmatpush1.bf16.msra.mxu0 0
    %1349 = vmatprep.subr.bf16.mxu0 0
    %1350 = vmatpush1.bf16.msra.mxu0 0
    %1351 = vmatprep.subr.bf16.mxu0 0
    %1352 = vmatpush1.bf16.msra.mxu0 0
    %1353 = vmatprep.subr.bf16.mxu0 0
    %1354 = vmatpush1.bf16.msra.mxu0 0
    %1355 = vmatprep.subr.bf16.mxu0 0
    %1356 = vmatpush1.bf16.msra.mxu0 0
    %1357 = vmatprep.subr.bf16.mxu0 0
    %1358 = vmatpush1.bf16.msra.mxu0 0
    %1359 = vmatprep.subr.bf16.mxu0 0
    %1360 = vmatpush1.bf16.msra.mxu0 0
    %1361 = vmatprep.subr.bf16.mxu0 0
    %1362 = vmatpush1.bf16.msra.mxu0 0
    %1363 = vmatprep.subr.bf16.mxu0 0
    %1364 = vmatpush1.bf16.msra.mxu0 0
    %1365 = vmatprep.subr.bf16.mxu0 0
    %1366 = vmatpush1.bf16.msra.mxu0 0
    %1367 = vmatprep.subr.bf16.mxu0 0
    %1368 = vmatpush1.bf16.msra.mxu0 0
    %1369 = vmatprep.subr.bf16.mxu0 0
    %1370 = vmatpush1.bf16.msra.mxu0 0
    %1371 = vmatprep.subr.bf16.mxu0 0
    %1372 = vmatpush1.bf16.msra.mxu0 0
    %1373 = vmatprep.subr.bf16.mxu0 0
    %1374 = vmatpush1.bf16.msra.mxu0 0
    %1375 = vmatprep.mubr.bf16.mxu0 0
    %1376 = vmatmul.mubr.bf16.gmra.mrb[0].mxu0 %v1341
    %v1377 = vpop.f32.mrb[0].mxu0
    %v1378 = vadd.f32 0.0, %v1377
    %v1379 = vpop.f32.mrb[0].mxu0
    %v1380 = vpop.f32.mrb[0].mxu0
    %v1381 = vpop.f32.mrb[0].mxu0
    %1382 = vdwg.mxu0
    %v1383 = vadd.f32 %v1224, %v1378
    %v1384 = vld [vmem:[%s10] sm:$0x1]
    %v1386 = vlaneseq
    %v1387 = vshrl.u32 %v1386, 7
    %v1388 = vsub.s32 0, %v1387
    %v1389 = vrot.slane %v1384, %v1388
    %v1391 = vadd.f32 %v918, %v1389
    %v1392 = vadd.f32 %v1383, %v1389
    %v1393 = vadd.f32 %v330, %v1391
    %v1394 = vadd.f32 %v331, %v1392
    %v1395 = vld [vmem:[%s11] sm:$0x1]
    %v1396 = vld [vmem:[%s12] sm:$0x1]
    %v1397 = vsel %vm288, %v1393, 0.0
    %1398 = vadd.xlane.f32.xlu0 %v1397
    %v1399 = vpop.xlane.xlu0 %1398
    %v1400 = vsel %vm288, %v1394, 0.0
    %1401 = vadd.xlane.f32.xlu0 %v1400
    %v1402 = vpop.xlane.xlu0 %1401
    %v1403 = vmul.f32 %v1399, %v295
    %v1404 = vmul.f32 %v1402, %v295
    %v1405 = vsub.f32 %v1393, %v1403
    %v1406 = vsub.f32 %v1394, %v1404
    %v1407 = vmul.f32 %v1405, %v1405
    %v1408 = vmul.f32 %v1406, %v1406
    %v1409 = vsel %vm288, %v1407, 0.0
    %1410 = vadd.xlane.f32.xlu0 %v1409
    %v1411 = vpop.xlane.xlu0 %1410
    %v1412 = vsel %vm288, %v1408, 0.0
    %1413 = vadd.xlane.f32.xlu0 %v1412
    %v1414 = vpop.xlane.xlu0 %1413
    %v1415 = vmul.f32 %v1411, %v295
    %v1416 = vmul.f32 %v1414, %v295
    %v1417 = vadd.f32 %v1415, 1e-12
    %v1418 = vadd.f32 %v1416, 1e-12
    %v1419 = vrsqrt.pop %v1417
    %v1420 = vrsqrt.pop %v1418
    %v1421 = vmul.f32 %v1405, %v1419
    %v1422 = vmul.f32 %v1406, %v1420
    %v1424 = vlaneseq
    %v1425 = vshrl.u32 %v1424, 7
    %v1426 = vsub.s32 0, %v1425
    %v1427 = vrot.slane %v1395, %v1426
    %v1429 = vmul.f32 %v1421, %v1427
    %v1430 = vmul.f32 %v1422, %v1427
    %v1432 = vlaneseq
    %v1433 = vshrl.u32 %v1432, 7
    %v1434 = vsub.s32 0, %v1433
    %v1435 = vrot.slane %v1396, %v1434
    %v1437 = vadd.f32 %v1429, %v1435
    %v1438 = vadd.f32 %v1430, %v1435
    %v1439 = vpack.c.bf16 %v1438, %v1437
    %v1440 = vld [vmem:[%s13] sm:$0xff]
    %v1441 = vld [vmem:[%s13 + $0x8] sm:$0xff]
    %v1442 = vld [vmem:[%s13 + $0x10] sm:$0xff]
    %v1443 = vld [vmem:[%s13 + $0x18] sm:$0xff]
    %v1444 = vld [vmem:[%s13 + $0x20] sm:$0xff]
    %v1445 = vld [vmem:[%s13 + $0x28] sm:$0xff]
    %v1446 = vld [vmem:[%s14] sm:$0x3]
    %v1448 = vlaneseq
    %v1449 = vshrl.u32 %v1448, 7
    %v1450 = vsub.s32 0, %v1449
    %v1451 = vrot.slane %v1446, %v1450
    %v1452 = vlaneseq
    %v1453 = vshrl.u32 %v1452, 7
    %v1454 = vsub.s32 1, %v1453
    %v1455 = vrot.slane %v1446, %v1454
    %v1464 = vunpack.c.l.b16 %v1440
    %v1465 = vunpack.c.h.b16 %v1440
    %v1466 = vunpack.c.l.b16 %v1441
    %v1467 = vunpack.c.h.b16 %v1441
    %v1468 = vunpack.c.l.b16 %v1442
    %v1469 = vunpack.c.h.b16 %v1442
    %v1470 = vunpack.c.l.b16 %v1443
    %v1471 = vunpack.c.h.b16 %v1443
    %v1472 = vunpack.c.l.b16 %v1444
    %v1473 = vunpack.c.h.b16 %v1444
    %v1474 = vunpack.c.l.b16 %v1445
    %v1475 = vunpack.c.h.b16 %v1445
    %v1476 = vpack.c.b16 %v1466, %v1464
    %v1477 = vpack.c.b16 %v1467, %v1465
    %v1478 = vpack.c.b16 %v1470, %v1468
    %v1479 = vpack.c.b16 %v1471, %v1469
    %v1480 = vpack.c.b16 %v1474, %v1472
    %v1481 = vpack.c.b16 %v1475, %v1473
    %v1489 = vsel %vm288, %v1439, 0
    %1491 = vmatprep.subr.bf16.mxu0 %v1477
    %1492 = vmatpush1.bf16.msra.mxu0 %v1476
    %1493 = vmatprep.subr.bf16.mxu0 %v1479
    %1494 = vmatpush1.bf16.msra.mxu0 %v1478
    %1495 = vmatprep.subr.bf16.mxu0 %v1481
    %1496 = vmatpush1.bf16.msra.mxu0 %v1480
    %1497 = vmatprep.subr.bf16.mxu0 0
    %1498 = vmatpush1.bf16.msra.mxu0 0
    %1499 = vmatprep.subr.bf16.mxu0 0
    %1500 = vmatpush1.bf16.msra.mxu0 0
    %1501 = vmatprep.subr.bf16.mxu0 0
    %1502 = vmatpush1.bf16.msra.mxu0 0
    %1503 = vmatprep.subr.bf16.mxu0 0
    %1504 = vmatpush1.bf16.msra.mxu0 0
    %1505 = vmatprep.subr.bf16.mxu0 0
    %1506 = vmatpush1.bf16.msra.mxu0 0
    %1507 = vmatprep.subr.bf16.mxu0 0
    %1508 = vmatpush1.bf16.msra.mxu0 0
    %1509 = vmatprep.subr.bf16.mxu0 0
    %1510 = vmatpush1.bf16.msra.mxu0 0
    %1511 = vmatprep.subr.bf16.mxu0 0
    %1512 = vmatpush1.bf16.msra.mxu0 0
    %1513 = vmatprep.subr.bf16.mxu0 0
    %1514 = vmatpush1.bf16.msra.mxu0 0
    %1515 = vmatprep.subr.bf16.mxu0 0
    %1516 = vmatpush1.bf16.msra.mxu0 0
    %1517 = vmatprep.subr.bf16.mxu0 0
    %1518 = vmatpush1.bf16.msra.mxu0 0
    %1519 = vmatprep.subr.bf16.mxu0 0
    %1520 = vmatpush1.bf16.msra.mxu0 0
    %1521 = vmatprep.subr.bf16.mxu0 0
    %1522 = vmatpush1.bf16.msra.mxu0 0
    %1523 = vmatprep.mubr.bf16.mxu0 0
    %1524 = vmatmul.mubr.bf16.gmra.mrb[0].mxu0 %v1489
    %v1525 = vpop.f32.mrb[0].mxu0
    %v1526 = vadd.f32 %v1451, %v1525
    %v1527 = vpop.f32.mrb[0].mxu0
    %v1528 = vadd.f32 %v1455, %v1527
    %v1529 = vpop.f32.mrb[0].mxu0
    %v1530 = vadd.f32 %v1451, %v1529
    %v1531 = vpop.f32.mrb[0].mxu0
    %v1532 = vadd.f32 %v1455, %v1531
    %1533 = vdwg.mxu0
    %v1534 = vmul.f32 %v1526, %v1526
    %v1535 = vmul.f32 %v1528, %v1528
    %v1536 = vmul.f32 %v1530, %v1530
    %v1537 = vmul.f32 %v1532, %v1532
    %v1538 = vmul.f32 %v1526, %v1534
    %v1539 = vmul.f32 %v1528, %v1535
    %v1540 = vmul.f32 %v1530, %v1536
    %v1541 = vmul.f32 %v1532, %v1537
    %v1542 = vmul.f32 %v1538, 0.044715
    %v1543 = vmul.f32 %v1539, 0.044715
    %v1544 = vmul.f32 %v1540, 0.044715
    %v1545 = vmul.f32 %v1541, 0.044715
    %v1546 = vadd.f32 %v1526, %v1542
    %v1547 = vadd.f32 %v1528, %v1543
    %v1548 = vadd.f32 %v1530, %v1544
    %v1549 = vadd.f32 %v1532, %v1545
    %v1550 = vmul.f32 %v1546, 0.7978846
    %v1551 = vmul.f32 %v1547, 0.7978846
    %v1552 = vmul.f32 %v1548, 0.7978846
    %v1553 = vmul.f32 %v1549, 0.7978846
    %v1554 = vtanh.pop %v1550
    %v1555 = vtanh.pop %v1551
    %v1556 = vtanh.pop %v1552
    %v1557 = vtanh.pop %v1553
    %v1558 = vadd.f32 %v1554, 1.0
    %v1559 = vadd.f32 %v1555, 1.0
    %v1560 = vadd.f32 %v1556, 1.0
    %v1561 = vadd.f32 %v1557, 1.0
    %v1562 = vmul.f32 %v1558, 0.5
    %v1563 = vmul.f32 %v1559, 0.5
    %v1564 = vmul.f32 %v1560, 0.5
    %v1565 = vmul.f32 %v1561, 0.5
    %v1566 = vmul.f32 %v1526, %v1562
    %v1567 = vmul.f32 %v1528, %v1563
    %v1568 = vmul.f32 %v1530, %v1564
    %v1569 = vmul.f32 %v1532, %v1565
    %v1570 = vpack.c.bf16 %v1568, %v1566
    %v1571 = vpack.c.bf16 %v1569, %v1567
    %v1572 = vld [vmem:[%s15] sm:$0xf]
    %v1573 = vld [vmem:[%s15 + $0x4] sm:$0xf]
    %v1574 = vld [vmem:[%s15 + $0x8] sm:$0xf]
    %v1575 = vld [vmem:[%s15 + $0xc] sm:$0xf]
    %v1576 = vld [vmem:[%s15 + $0x10] sm:$0xf]
    %v1577 = vld [vmem:[%s15 + $0x14] sm:$0xf]
    %v1578 = vld [vmem:[%s15 + $0x18] sm:$0xf]
    %v1579 = vld [vmem:[%s15 + $0x1c] sm:$0xf]
    %v1580 = vld [vmem:[%s15 + $0x20] sm:$0xf]
    %v1581 = vld [vmem:[%s15 + $0x24] sm:$0xf]
    %v1582 = vld [vmem:[%s15 + $0x28] sm:$0xf]
    %v1583 = vld [vmem:[%s15 + $0x2c] sm:$0xf]
    %v1584 = vld [vmem:[%s15 + $0x30] sm:$0xf]
    %v1585 = vld [vmem:[%s15 + $0x34] sm:$0xf]
    %v1586 = vld [vmem:[%s15 + $0x38] sm:$0xf]
    %v1587 = vld [vmem:[%s15 + $0x3c] sm:$0xf]
    %v1588 = vld [vmem:[%s15 + $0x40] sm:$0xf]
    %v1589 = vld [vmem:[%s15 + $0x44] sm:$0xf]
    %v1590 = vld [vmem:[%s15 + $0x48] sm:$0xf]
    %v1591 = vld [vmem:[%s15 + $0x4c] sm:$0xf]
    %v1592 = vld [vmem:[%s15 + $0x50] sm:$0xf]
    %v1593 = vld [vmem:[%s15 + $0x54] sm:$0xf]
    %v1594 = vld [vmem:[%s15 + $0x58] sm:$0xf]
    %v1595 = vld [vmem:[%s15 + $0x5c] sm:$0xf]
    %v1596 = vld [vmem:[%s16] sm:$0x1]
    %v1598 = vlaneseq
    %v1599 = vshrl.u32 %v1598, 7
    %v1600 = vsub.s32 0, %v1599
    %v1601 = vrot.slane %v1596, %v1600
    %v1627 = vunpack.c.l.b16 %v1572
    %v1628 = vunpack.c.l.b16 %v1573
    %v1629 = vunpack.c.l.b16 %v1574
    %v1630 = vunpack.c.l.b16 %v1575
    %v1631 = vunpack.c.l.b16 %v1576
    %v1632 = vunpack.c.l.b16 %v1577
    %v1633 = vunpack.c.l.b16 %v1578
    %v1634 = vunpack.c.l.b16 %v1579
    %v1635 = vunpack.c.l.b16 %v1580
    %v1636 = vunpack.c.l.b16 %v1581
    %v1637 = vunpack.c.l.b16 %v1582
    %v1638 = vunpack.c.l.b16 %v1583
    %v1639 = vunpack.c.l.b16 %v1584
    %v1640 = vunpack.c.l.b16 %v1585
    %v1641 = vunpack.c.l.b16 %v1586
    %v1642 = vunpack.c.l.b16 %v1587
    %v1643 = vunpack.c.l.b16 %v1588
    %v1644 = vunpack.c.l.b16 %v1589
    %v1645 = vunpack.c.l.b16 %v1590
    %v1646 = vunpack.c.l.b16 %v1591
    %v1647 = vunpack.c.l.b16 %v1592
    %v1648 = vunpack.c.l.b16 %v1593
    %v1649 = vunpack.c.l.b16 %v1594
    %v1650 = vunpack.c.l.b16 %v1595
    %v1651 = vpack.c.b16 %v1628, %v1627
    %v1652 = vpack.c.b16 %v1630, %v1629
    %v1653 = vpack.c.b16 %v1632, %v1631
    %v1654 = vpack.c.b16 %v1634, %v1633
    %v1655 = vpack.c.b16 %v1636, %v1635
    %v1656 = vpack.c.b16 %v1638, %v1637
    %v1657 = vpack.c.b16 %v1640, %v1639
    %v1658 = vpack.c.b16 %v1642, %v1641
    %v1659 = vpack.c.b16 %v1644, %v1643
    %v1660 = vpack.c.b16 %v1646, %v1645
    %v1661 = vpack.c.b16 %v1648, %v1647
    %v1662 = vpack.c.b16 %v1650, %v1649
    %vm1675 = vcmask 523264
    %v1677 = vsel %vm1675, %v1571, 0
    %1679 = vmatprep.subr.bf16.mxu0 0
    %1680 = vmatpush1.bf16.msra.mxu0 %v1651
    %1681 = vmatprep.subr.bf16.mxu0 0
    %1682 = vmatpush1.bf16.msra.mxu0 %v1652
    %1683 = vmatprep.subr.bf16.mxu0 0
    %1684 = vmatpush1.bf16.msra.mxu0 %v1653
    %1685 = vmatprep.subr.bf16.mxu0 0
    %1686 = vmatpush1.bf16.msra.mxu0 %v1654
    %1687 = vmatprep.subr.bf16.mxu0 0
    %1688 = vmatpush1.bf16.msra.mxu0 %v1655
    %1689 = vmatprep.subr.bf16.mxu0 0
    %1690 = vmatpush1.bf16.msra.mxu0 %v1656
    %1691 = vmatprep.subr.bf16.mxu0 0
    %1692 = vmatpush1.bf16.msra.mxu0 %v1657
    %1693 = vmatprep.subr.bf16.mxu0 0
    %1694 = vmatpush1.bf16.msra.mxu0 %v1658
    %1695 = vmatprep.subr.bf16.mxu0 0
    %1696 = vmatpush1.bf16.msra.mxu0 %v1659
    %1697 = vmatprep.subr.bf16.mxu0 0
    %1698 = vmatpush1.bf16.msra.mxu0 %v1660
    %1699 = vmatprep.subr.bf16.mxu0 0
    %1700 = vmatpush1.bf16.msra.mxu0 %v1661
    %1701 = vmatprep.subr.bf16.mxu0 0
    %1702 = vmatpush1.bf16.msra.mxu0 %v1662
    %1703 = vmatprep.subr.bf16.mxu0 0
    %1704 = vmatpush1.bf16.msra.mxu0 0
    %1705 = vmatprep.subr.bf16.mxu0 0
    %1706 = vmatpush1.bf16.msra.mxu0 0
    %1707 = vmatprep.subr.bf16.mxu0 0
    %1708 = vmatpush1.bf16.msra.mxu0 0
    %1709 = vmatprep.subr.bf16.mxu0 0
    %1710 = vmatpush1.bf16.msra.mxu0 0
    %1711 = vmatprep.mubr.bf16.mxu0 %v1677
    %1712 = vmatmul.mubr.bf16.gmra.mrb[0].mxu0 %v1570
    %v1713 = vpop.f32.mrb[0].mxu0
    %v1714 = vadd.f32 %v1601, %v1713
    %v1715 = vpop.f32.mrb[0].mxu0
    %v1716 = vpop.f32.mrb[0].mxu0
    %v1717 = vadd.f32 %v1601, %v1716
    %v1718 = vpop.f32.mrb[0].mxu0
    %1719 = vdwg.mxu0
    %v1720 = vadd.f32 %v1437, %v1714
    %v1721 = vadd.f32 %v1438, %v1717
    %v1722 = vld [vmem:[%s17] sm:$0x1]
    %v1723 = vld [vmem:[%s18] sm:$0x1]
    %v1724 = vsel %vm288, %v1720, 0.0
    %1725 = vadd.xlane.f32.xlu0 %v1724
    %v1726 = vpop.xlane.xlu0 %1725
    %v1727 = vsel %vm288, %v1721, 0.0
    %1728 = vadd.xlane.f32.xlu0 %v1727
    %v1729 = vpop.xlane.xlu0 %1728
    %v1730 = vmul.f32 %v1726, %v295
    %v1731 = vmul.f32 %v1729, %v295
    %v1732 = vsub.f32 %v1720, %v1730
    %v1733 = vsub.f32 %v1721, %v1731
    %v1734 = vmul.f32 %v1732, %v1732
    %v1735 = vmul.f32 %v1733, %v1733
    %v1736 = vsel %vm288, %v1734, 0.0
    %1737 = vadd.xlane.f32.xlu0 %v1736
    %v1738 = vpop.xlane.xlu0 %1737
    %v1739 = vsel %vm288, %v1735, 0.0
    %1740 = vadd.xlane.f32.xlu0 %v1739
    %v1741 = vpop.xlane.xlu0 %1740
    %v1742 = vmul.f32 %v1738, %v295
    %v1743 = vmul.f32 %v1741, %v295
    %v1744 = vadd.f32 %v1742, 1e-12
    %v1745 = vadd.f32 %v1743, 1e-12
    %v1746 = vrsqrt.pop %v1744
    %v1747 = vrsqrt.pop %v1745
    %v1748 = vmul.f32 %v1732, %v1746
    %v1749 = vmul.f32 %v1733, %v1747
    %v1751 = vlaneseq
    %v1752 = vshrl.u32 %v1751, 7
    %v1753 = vsub.s32 0, %v1752
    %v1754 = vrot.slane %v1722, %v1753
    %v1756 = vmul.f32 %v1748, %v1754
    %v1757 = vmul.f32 %v1749, %v1754
    %v1759 = vlaneseq
    %v1760 = vshrl.u32 %v1759, 7
    %v1761 = vsub.s32 0, %v1760
    %v1762 = vrot.slane %v1723, %v1761
    %v1764 = vadd.f32 %v1756, %v1762
    %v1765 = vadd.f32 %v1757, %v1762
    %v1766 = vlaneseq
    %v1767 = vshrl.u32 %v1766, 7
    %v1768 = vmul.u32 %v1767, 8
    %vm1769 = vcmp.eq.s32.totalorder %v81, %v1768
    %v1770 = vsel %vm1769, 1, 0
    %v1771 = vcvt.s32.f32 %v1770
    %v1773 = vsel %vm431, %v1771, 0
    %1775 = vmatprep.subr.mxu0 0.0
    %1776 = vmatpush1.msra.mxu0 %v1764
    %1777 = vmatprep.subr.mxu0 0.0
    %1778 = vmatpush1.msra.mxu0 %v1765
    %1779 = vmatprep.subr.mxu0 0.0
    %1780 = vmatpush1.msra.mxu0 0.0
    %1781 = vmatprep.subr.mxu0 0.0
    %1782 = vmatpush1.msra.mxu0 0.0
    %1783 = vmatprep.subr.mxu0 0.0
    %1784 = vmatpush1.msra.mxu0 0.0
    %1785 = vmatprep.subr.mxu0 0.0
    %1786 = vmatpush1.msra.mxu0 0.0
    %1787 = vmatprep.subr.mxu0 0.0
    %1788 = vmatpush1.msra.mxu0 0.0
    %1789 = vmatprep.subr.mxu0 0.0
    %1790 = vmatpush1.msra.mxu0 0.0
    %1791 = vmatprep.subr.mxu0 0.0
    %1792 = vmatpush1.msra.mxu0 0.0
    %1793 = vmatprep.subr.mxu0 0.0
    %1794 = vmatpush1.msra.mxu0 0.0
    %1795 = vmatprep.subr.mxu0 0.0
    %1796 = vmatpush1.msra.mxu0 0.0
    %1797 = vmatprep.subr.mxu0 0.0
    %1798 = vmatpush1.msra.mxu0 0.0
    %1799 = vmatprep.subr.mxu0 0.0
    %1800 = vmatpush1.msra.mxu0 0.0
    %1801 = vmatprep.subr.mxu0 0.0
    %1802 = vmatpush1.msra.mxu0 0.0
    %1803 = vmatprep.subr.mxu0 0.0
    %1804 = vmatpush1.msra.mxu0 0.0
    %1805 = vmatprep.subr.mxu0 0.0
    %1806 = vmatpush1.msra.mxu0 0.0
    %1807 = vmatprep.subr.mxu0 0.0
    %1808 = vmatpush1.msra.mxu0 0.0
    %1809 = vmatprep.subr.mxu0 0.0
    %1810 = vmatpush1.msra.mxu0 0.0
    %1811 = vmatprep.subr.mxu0 0.0
    %1812 = vmatpush1.msra.mxu0 0.0
    %1813 = vmatprep.subr.mxu0 0.0
    %1814 = vmatpush1.msra.mxu0 0.0
    %1815 = vmatprep.subr.mxu0 0.0
    %1816 = vmatpush1.msra.mxu0 0.0
    %1817 = vmatprep.subr.mxu0 0.0
    %1818 = vmatpush1.msra.mxu0 0.0
    %1819 = vmatprep.subr.mxu0 0.0
    %1820 = vmatpush1.msra.mxu0 0.0
    %1821 = vmatprep.subr.mxu0 0.0
    %1822 = vmatpush1.msra.mxu0 0.0
    %1823 = vmatprep.subr.mxu0 0.0
    %1824 = vmatpush1.msra.mxu0 0.0
    %1825 = vmatprep.subr.mxu0 0.0
    %1826 = vmatpush1.msra.mxu0 0.0
    %1827 = vmatprep.subr.mxu0 0.0
    %1828 = vmatpush1.msra.mxu0 0.0
    %1829 = vmatprep.subr.mxu0 0.0
    %1830 = vmatpush1.msra.mxu0 0.0
    %1831 = vmatprep.subr.mxu0 0.0
    %1832 = vmatpush1.msra.mxu0 0.0
    %1833 = vmatprep.subr.mxu0 0.0
    %1834 = vmatpush1.msra.mxu0 0.0
    %1835 = vmatprep.subr.mxu0 0.0
    %1836 = vmatpush1.msra.mxu0 0.0
    %1837 = vmatprep.subr.mxu0 0.0
    %1838 = vmatpush1.msra.mxu0 0.0
    %1839 = vmatprep.mubr.f32.mxu0 0.0
    %1840 = vmatmul.mubr.f32.gmra.mrb[0].mxu0 %v1773
    %v1841 = vpop.f32.mrb[0].mxu0
    %v1842 = vadd.f32 0.0, %v1841
    %v1843 = vpop.f32.mrb[0].mxu0
    %1844 = vdwg.mxu0
    %v1845 = vpack.c.bf16 %v1842, %v1842
    %v1846 = vld [vmem:[%s19] sm:$0xf]
    %v1847 = vld [vmem:[%s19 + $0x4] sm:$0xf]
    %v1848 = vld [vmem:[%s19 + $0x8] sm:$0xf]
    %v1849 = vld [vmem:[%s19 + $0xc] sm:$0xf]
    %v1850 = vld [vmem:[%s19 + $0x10] sm:$0xf]
    %v1851 = vld [vmem:[%s19 + $0x14] sm:$0xf]
    %v1852 = vld [vmem:[%s20] sm:$0x1]
    %v1854 = vlaneseq
    %v1855 = vshrl.u32 %v1854, 7
    %v1856 = vsub.s32 0, %v1855
    %v1857 = vrot.slane %v1852, %v1856
    %v1865 = vunpack.c.l.b16 %v1846
    %v1866 = vunpack.c.l.b16 %v1847
    %v1867 = vunpack.c.l.b16 %v1848
    %v1868 = vunpack.c.l.b16 %v1849
    %v1869 = vunpack.c.l.b16 %v1850
    %v1870 = vunpack.c.l.b16 %v1851
    %v1871 = vpack.c.b16 %v1866, %v1865
    %v1872 = vpack.c.b16 %v1868, %v1867
    %v1873 = vpack.c.b16 %v1870, %v1869
    %v1878 = vsel %vm288, %v1845, 0
    %1880 = vmatprep.subr.bf16.mxu0 0
    %1881 = vmatpush1.bf16.msra.mxu0 %v1871
    %1882 = vmatprep.subr.bf16.mxu0 0
    %1883 = vmatpush1.bf16.msra.mxu0 %v1872
    %1884 = vmatprep.subr.bf16.mxu0 0
    %1885 = vmatpush1.bf16.msra.mxu0 %v1873
    %1886 = vmatprep.subr.bf16.mxu0 0
    %1887 = vmatpush1.bf16.msra.mxu0 0
    %1888 = vmatprep.subr.bf16.mxu0 0
    %1889 = vmatpush1.bf16.msra.mxu0 0
    %1890 = vmatprep.subr.bf16.mxu0 0
    %1891 = vmatpush1.bf16.msra.mxu0 0
    %1892 = vmatprep.subr.bf16.mxu0 0
    %1893 = vmatpush1.bf16.msra.mxu0 0
    %1894 = vmatprep.subr.bf16.mxu0 0
    %1895 = vmatpush1.bf16.msra.mxu0 0
    %1896 = vmatprep.subr.bf16.mxu0 0
    %1897 = vmatpush1.bf16.msra.mxu0 0
    %1898 = vmatprep.subr.bf16.mxu0 0
    %1899 = vmatpush1.bf16.msra.mxu0 0
    %1900 = vmatprep.subr.bf16.mxu0 0
    %1901 = vmatpush1.bf16.msra.mxu0 0
    %1902 = vmatprep.subr.bf16.mxu0 0
    %1903 = vmatpush1.bf16.msra.mxu0 0
    %1904 = vmatprep.subr.bf16.mxu0 0
    %1905 = vmatpush1.bf16.msra.mxu0 0
    %1906 = vmatprep.subr.bf16.mxu0 0
    %1907 = vmatpush1.bf16.msra.mxu0 0
    %1908 = vmatprep.subr.bf16.mxu0 0
    %1909 = vmatpush1.bf16.msra.mxu0 0
    %1910 = vmatprep.subr.bf16.mxu0 0
    %1911 = vmatpush1.bf16.msra.mxu0 0
    %1912 = vmatprep.mubr.bf16.mxu0 0
    %1913 = vmatmul.mubr.bf16.gmra.mrb[0].mxu0 %v1878
    %v1914 = vpop.f32.mrb[0].mxu0
    %v1915 = vadd.f32 %v1857, %v1914
    %v1916 = vpop.f32.mrb[0].mxu0
    %v1917 = vpop.f32.mrb[0].mxu0
    %v1918 = vpop.f32.mrb[0].mxu0
    %1919 = vdwg.mxu0
    %v1920 = vtanh.pop %v1915
    %v1921 = vpack.c.bf16 %v1920, %v1920
    %v1922 = vld [vmem:[%s21] sm:$0xf]
    %v1923 = vld [vmem:[%s21 + $0x4] sm:$0xf]
    %v1924 = vld [vmem:[%s21 + $0x8] sm:$0xf]
    %v1925 = vld [vmem:[%s21 + $0xc] sm:$0xf]
    %v1926 = vld [vmem:[%s21 + $0x10] sm:$0xf]
    %v1927 = vld [vmem:[%s21 + $0x14] sm:$0xf]
    %v1928 = vld [vmem:[%s22] sm:$0x1]
    %v1930 = vlaneseq
    %v1931 = vshrl.u32 %v1930, 7
    %v1932 = vsub.s32 0, %v1931
    %v1933 = vrot.slane %v1928, %v1932
    %v1941 = vunpack.c.l.b16 %v1922
    %v1942 = vunpack.c.l.b16 %v1923
    %v1943 = vunpack.c.l.b16 %v1924
    %v1944 = vunpack.c.l.b16 %v1925
    %v1945 = vunpack.c.l.b16 %v1926
    %v1946 = vunpack.c.l.b16 %v1927
    %v1947 = vpack.c.b16 %v1942, %v1941
    %v1948 = vpack.c.b16 %v1944, %v1943
    %v1949 = vpack.c.b16 %v1946, %v1945
    %v1954 = vsel %vm288, %v1921, 0
    %1956 = vmatprep.subr.bf16.mxu0 0
    %1957 = vmatpush1.bf16.msra.mxu0 %v1947
    %1958 = vmatprep.subr.bf16.mxu0 0
    %1959 = vmatpush1.bf16.msra.mxu0 %v1948
    %1960 = vmatprep.subr.bf16.mxu0 0
    %1961 = vmatpush1.bf16.msra.mxu0 %v1949
    %1962 = vmatprep.subr.bf16.mxu0 0
    %1963 = vmatpush1.bf16.msra.mxu0 0
    %1964 = vmatprep.subr.bf16.mxu0 0
    %1965 = vmatpush1.bf16.msra.mxu0 0
    %1966 = vmatprep.subr.bf16.mxu0 0
    %1967 = vmatpush1.bf16.msra.mxu0 0
    %1968 = vmatprep.subr.bf16.mxu0 0
    %1969 = vmatpush1.bf16.msra.mxu0 0
    %1970 = vmatprep.subr.bf16.mxu0 0
    %1971 = vmatpush1.bf16.msra.mxu0 0
    %1972 = vmatprep.subr.bf16.mxu0 0
    %1973 = vmatpush1.bf16.msra.mxu0 0
    %1974 = vmatprep.subr.bf16.mxu0 0
    %1975 = vmatpush1.bf16.msra.mxu0 0
    %1976 = vmatprep.subr.bf16.mxu0 0
    %1977 = vmatpush1.bf16.msra.mxu0 0
    %1978 = vmatprep.subr.bf16.mxu0 0
    %1979 = vmatpush1.bf16.msra.mxu0 0
    %1980 = vmatprep.subr.bf16.mxu0 0
    %1981 = vmatpush1.bf16.msra.mxu0 0
    %1982 = vmatprep.subr.bf16.mxu0 0
    %1983 = vmatpush1.bf16.msra.mxu0 0
    %1984 = vmatprep.subr.bf16.mxu0 0
    %1985 = vmatpush1.bf16.msra.mxu0 0
    %1986 = vmatprep.subr.bf16.mxu0 0
    %1987 = vmatpush1.bf16.msra.mxu0 0
    %1988 = vmatprep.mubr.bf16.mxu0 0
    %1989 = vmatmul.mubr.bf16.gmra.mrb[0].mxu0 %v1954
    %v1990 = vpop.f32.mrb[0].mxu0
    %v1991 = vadd.f32 %v1933, %v1990
    %v1992 = vpop.f32.mrb[0].mxu0
    %v1993 = vpop.f32.mrb[0].mxu0
    %v1994 = vpop.f32.mrb[0].mxu0
    %1995 = vdwg.mxu0
    %1996 = vst [vmem:[#allocation2] sm:$0x3] %v1991
    // Predicated region
    $region94: #{bert_spc_forward.1} parent=1 // pred_check
      _
    $region95: #{bert_spc_forward.1} parent=1 // pred_check_branch
      %1998 = sbr.rel (0) target = $region97
    $region96: #{bert_spc_forward.1} parent=1 // pred_region
      %s2000 = ssub.s32 32, 32
      %2001 = vsyncadd [#allocation3], %s2000
      %s2003 = sshll.u32 [#allocation2], 4
      %s2004 = int_to_ptr.vmem [resolvable:$true] %s2003
      %2006 = dma.vmem_to_hbm [thread:$0]  %s2004, 32, %s23, [#allocation3]
    $region97: #{bert_spc_forward.1} parent=1 // pred_fallthru
      _
    // Predicated region
    $region98: #{bert_spc_forward.1} parent=1 // pred_check
      _
    $region99: #{bert_spc_forward.1} parent=1 // pred_check_branch
      %2008 = sbr.rel (0) target = $region101
    $region100: #{bert_spc_forward.1} parent=1 // pred_region
      %2009 = dma.done [#allocation3], 32
    $region101: #{bert_spc_forward.1} parent=1 // pred_fallthru
      _
    %2010 = vsyncpa [#allocation3], 1

</llo_original>
